<compile_context>
chip_gen: v6e
topology: v6e:2x2x1
jax: 0.10.0
libtpu: 0.0.40
codegen_flags: <defaults>
</compile_context>

<pallas_src>
import functools

import jax
import jax.numpy as jnp
from jax import lax
from jax.experimental import pallas as pl
from jax.experimental.pallas import tpu as pltpu


def _dilconv_conv_kernel(x_ref, dw_ref, pw_ref, y_ref, ssum_ref, ssq_ref,
                         xp_scr, *, H, W, Hp, Wp, Ho, Wo, C_in, C_out,
                         KH, KW, stride, dilation, padding):
    """Phase 1: ReLU -> depthwise dilated conv -> 1x1 conv, + partial BN stats.

    x_ref    : (1, H, W, C_in)   bf16, un-padded NHWC sample
    dw_ref   : (KH*KW, C_in)     f32, depthwise taps (per channel)
    pw_ref   : (C_out, C_in)     bf16, pointwise weight (PyTorch layout)
    y_ref    : (1, C_out, M)     f32, pre-BN conv output, M = Ho*Wo (lane-dense)
    ssum_ref : (1, C_out, 1)     f32, per-sample sum over spatial positions
    ssq_ref  : (1, C_out, 1)     f32, per-sample sum of squares
    xp_scr   : (Hp, Wp, C_in)    f32 VMEM scratch: zero-padded + ReLU'd input
    """
    # In-kernel zero padding: zero-fill the scratch, write the ReLU'd sample
    # into the interior (avoids a materialized jnp.pad copy in HBM).
    xp_scr[...] = jnp.zeros((Hp, Wp, C_in), jnp.float32)
    xp_scr[padding:padding + H, padding:padding + W, :] = jnp.maximum(
        x_ref[0].astype(jnp.float32), 0.0)
    xp = xp_scr[...]

    # For stride > 1, pre-extract the W stride-phases once so each tap reads a
    # contiguous column window (a strided sublane slice per tap would trigger
    # an XLU relayout per tap).  For stride == 1 this is the identity.
    w_phases = {}

    def w_phase(p):
        if p not in w_phases:
            w_phases[p] = xp if stride == 1 else xp[:, p::stride, :]
        return w_phases[p]

    dw = dw_ref[...]
    acc = jnp.zeros((Ho, Wo, C_in), jnp.float32)
    for kh in range(KH):
        h0 = kh * dilation
        # H is neither the lane nor sublane dim -> strided H slice is cheap.
        h_sl = slice(h0, h0 + (Ho - 1) * stride + 1, stride)
        for kw in range(KW):
            w0 = kw * dilation
            win = w_phase(w0 % stride)[h_sl, w0 // stride:w0 // stride + Wo, :]
            acc = acc + win * dw[kh * KW + kw].reshape(1, 1, C_in)

    # Pointwise 1x1 conv as a bf16 MXU matmul with f32 accumulation, computed
    # directly in transposed form (C_out, C_in) . (M, C_in)^T -> (C_out, M) so
    # the result is channel-major and lane-dense (M = Ho*Wo >= 128 in lanes).
    flat = acc.reshape(Ho * Wo, C_in).astype(jnp.bfloat16)
    y = lax.dot_general(pw_ref[...], flat,
                        dimension_numbers=(((1,), (1,)), ((), ())),
                        preferred_element_type=jnp.float32)        # (C_out, M)

    y_ref[0] = y
    # Single-pass partial BatchNorm statistics for this sample.
    ssum_ref[0] = jnp.sum(y, axis=1, keepdims=True)
    ssq_ref[0] = jnp.sum(y * y, axis=1, keepdims=True)


def _bn_apply_kernel(y_ref, scale_ref, shift_ref, out_ref):
    """Phase 2: apply the folded BatchNorm affine transform (lane-dense)."""
    out_ref[0] = y_ref[0] * scale_ref[...] + shift_ref[...]


def dil_conv_forward(x_nchw, dw_weight, pw_weight, gamma, beta, *,
                     kernel_size, stride, padding, dilation, eps=1e-5):
    """DilConv forward. x_nchw: (N, C_in, H, W); returns (N, C_out, Ho, Wo)."""
    N, C_in, H, W = x_nchw.shape
    C_out = pw_weight.shape[0]
    KH = KW = kernel_size
    Ho = (H + 2 * padding - dilation * (KH - 1) - 1) // stride + 1
    Wo = (W + 2 * padding - dilation * (KW - 1) - 1) // stride + 1
    M = Ho * Wo
    Hp = H + 2 * padding
    Wp = W + 2 * padding

    # NCHW -> NHWC once, fused with the bf16 downcast (half-size HBM copy).
    # TODO(synk): accept NHWC activations directly to drop this input transpose.
    x_nhwc = jnp.transpose(x_nchw, (0, 2, 3, 1)).astype(jnp.bfloat16)
    # PyTorch depthwise weight (C_in, 1, KH, KW) -> (KH*KW, C_in), kept in f32.
    dww = jnp.transpose(dw_weight.reshape(C_in, KH * KW), (1, 0)).astype(jnp.float32)
    # PyTorch pointwise weight (C_out, C_in, 1, 1) -> (C_out, C_in), bf16 MXU operand.
    pwT = pw_weight.reshape(C_out, C_in).astype(jnp.bfloat16)

    conv_kernel = functools.partial(
        _dilconv_conv_kernel,
        H=H, W=W, Hp=Hp, Wp=Wp, Ho=Ho, Wo=Wo, C_in=C_in, C_out=C_out,
        KH=KH, KW=KW, stride=stride, dilation=dilation, padding=padding)

    flops = 2 * N * M * C_in * (KH * KW + C_out)
    bytes_accessed = int(N * H * W * C_in * 2 + dww.size * 4 + pwT.size * 2
                         + N * C_out * M * 4 + 2 * N * C_out * 4)

    y, ssum, ssq = pl.pallas_call(
        conv_kernel,
        out_shape=(jax.ShapeDtypeStruct((N, C_out, M), jnp.float32),
                   jax.ShapeDtypeStruct((N, C_out, 1), jnp.float32),
                   jax.ShapeDtypeStruct((N, C_out, 1), jnp.float32)),
        grid_spec=pltpu.PrefetchScalarGridSpec(
            num_scalar_prefetch=0,
            grid=(N,),
            in_specs=[
                pl.BlockSpec((1, H, W, C_in), lambda n: (n, 0, 0, 0)),
                pl.BlockSpec((KH * KW, C_in), lambda n: (0, 0)),
                pl.BlockSpec((C_out, C_in), lambda n: (0, 0)),
            ],
            out_specs=[
                pl.BlockSpec((1, C_out, M), lambda n: (n, 0, 0)),
                pl.BlockSpec((1, C_out, 1), lambda n: (n, 0, 0)),
                pl.BlockSpec((1, C_out, 1), lambda n: (n, 0, 0)),
            ],
            scratch_shapes=[pltpu.VMEM((Hp, Wp, C_in), jnp.float32)]),
        compiler_params=pltpu.CompilerParams(
            dimension_semantics=("parallel",),
            vmem_limit_bytes=32 * 1024 * 1024),
        cost_estimate=pl.CostEstimate(flops=flops, transcendentals=0,
                                      bytes_accessed=bytes_accessed),
    )(x_nhwc, dww, pwT)

    # Fold the partial statistics into BN scale/shift (tiny O(C_out) math).
    count = float(N * M)
    mean = jnp.sum(ssum[:, :, 0], axis=0) / count                   # (C_out,)
    var = jnp.maximum(jnp.sum(ssq[:, :, 0], axis=0) / count - mean * mean, 0.0)
    scale = gamma.astype(jnp.float32) * lax.rsqrt(var + eps)
    shift = beta.astype(jnp.float32) - mean * scale

    out = pl.pallas_call(
        _bn_apply_kernel,
        out_shape=jax.ShapeDtypeStruct((N, C_out, M), jnp.float32),
        grid_spec=pltpu.PrefetchScalarGridSpec(
            num_scalar_prefetch=0,
            grid=(N,),
            in_specs=[
                pl.BlockSpec((1, C_out, M), lambda n: (n, 0, 0)),
                pl.BlockSpec((C_out, 1), lambda n: (0, 0)),
                pl.BlockSpec((C_out, 1), lambda n: (0, 0)),
            ],
            out_specs=pl.BlockSpec((1, C_out, M), lambda n: (n, 0, 0))),
        compiler_params=pltpu.CompilerParams(
            dimension_semantics=("parallel",),
            vmem_limit_bytes=32 * 1024 * 1024),
    )(y, scale.reshape(C_out, 1), shift.reshape(C_out, 1))

    # Channel-major already -> metadata-only reshape back to NCHW.
    return out.reshape(N, C_out, Ho, Wo)


def _reference(x_nchw, dw_weight, pw_weight, gamma, beta, *,
               kernel_size, stride, padding, dilation, eps=1e-5):
    """Pure-JAX reference matching the kernel's mixed precision
    (bf16 activations / bf16 1x1-matmul operands, f32 accumulation)."""
    x = jnp.maximum(x_nchw.astype(jnp.bfloat16).astype(jnp.float32), 0.0)
    C_in = x.shape[1]
    y = lax.conv_general_dilated(
        x, dw_weight.astype(jnp.float32),
        window_strides=(stride, stride),
        padding=[(padding, padding), (padding, padding)],
        rhs_dilation=(dilation, dilation),
        dimension_numbers=("NCHW", "OIHW", "NCHW"),
        feature_group_count=C_in)
    y = y.astype(jnp.bfloat16).astype(jnp.float32)
    pw = pw_weight.astype(jnp.bfloat16).astype(jnp.float32)
    y = lax.conv_general_dilated(
        y, pw, window_strides=(1, 1), padding=[(0, 0), (0, 0)],
        dimension_numbers=("NCHW", "OIHW", "NCHW"))
    mean = jnp.mean(y, axis=(0, 2, 3), keepdims=True)
    var = jnp.mean((y - mean) ** 2, axis=(0, 2, 3), keepdims=True)
    yhat = (y - mean) * lax.rsqrt(var + eps)
    return yhat * gamma.reshape(1, -1, 1, 1) + beta.reshape(1, -1, 1, 1)


if __name__ == "__main__":
    # Small DilConv config (dil_conv_3x3 from DARTS): k=3, stride=1, pad=2, dil=2.
    N, C_in, C_out, H, W = 2, 8, 8, 16, 16
    kernel_size, stride, padding, dilation = 3, 1, 2, 2

    key = jax.random.PRNGKey(0)
    kx, kdw, kpw, kg, kb = jax.random.split(key, 5)
    x = jax.random.normal(kx, (N, C_in, H, W), jnp.float32)
    dw_weight = jax.random.normal(kdw, (C_in, 1, kernel_size, kernel_size), jnp.float32) * 0.2
    pw_weight = jax.random.normal(kpw, (C_out, C_in, 1, 1), jnp.float32) * 0.2
    gamma = jax.random.normal(kg, (C_out,), jnp.float32) * 0.1 + 1.0
    beta = jax.random.normal(kb, (C_out,), jnp.float32) * 0.1

    out = dil_conv_forward(
        x, dw_weight, pw_weight, gamma, beta,
        kernel_size=kernel_size, stride=stride, padding=padding, dilation=dilation)
    out = jax.block_until_ready(out)

    ref = _reference(
        x, dw_weight, pw_weight, gamma, beta,
        kernel_size=kernel_size, stride=stride, padding=padding, dilation=dilation)
    ref = jax.block_until_ready(ref)

    assert out.shape == (N, C_out, H, W), out.shape
    max_err = float(jnp.max(jnp.abs(out - ref)))
    assert jnp.allclose(out, ref, atol=5e-3, rtol=5e-3), max_err
    print("KERNEL_OK")
</pallas_src>

<mosaic_0001>
module attributes {stable_mosaic.version = 11 : i64} {
  func.func @_dilconv_conv_kernel(%arg0: i32, %arg1: memref<1x16x16x8xbf16, #tpu.memory_space<vmem>>, %arg2: memref<9x8xf32, #tpu.memory_space<vmem>>, %arg3: memref<8x8xbf16, #tpu.memory_space<vmem>>, %arg4: memref<1x8x256xf32, #tpu.memory_space<vmem>>, %arg5: memref<1x8x1xf32, #tpu.memory_space<vmem>>, %arg6: memref<1x8x1xf32, #tpu.memory_space<vmem>>, %arg7: memref<20x20x8xf32, #tpu.memory_space<vmem>>) attributes {dimension_semantics = [#tpu.dimension_semantics<parallel>], iteration_bounds = array<i64: 2>, scalar_prefetch = 0 : i64, scratch_operands = 1 : i64, tpu.core_type = #tpu.core_type<tc>, window_params = [{transform_indices = @transform_0, window_bounds = array<i64: 1, 16, 16, 8>}, {pipeline_mode = #tpu.pipeline_mode<synchronous>, transform_indices = @transform_1, window_bounds = array<i64: 9, 8>}, {pipeline_mode = #tpu.pipeline_mode<synchronous>, transform_indices = @transform_2, window_bounds = array<i64: 8, 8>}, {transform_indices = @transform_3, window_bounds = array<i64: 1, 8, 256>}, {transform_indices = @transform_4, window_bounds = array<i64: 1, 8, 1>}, {transform_indices = @transform_5, window_bounds = array<i64: 1, 8, 1>}]} {
    %cst = arith.constant 0.000000e+00 : f32
    %0 = vector.broadcast %cst : f32 to vector<20x20x8xf32>
    %c0 = arith.constant 0 : index
    %c0_0 = arith.constant 0 : index
    %c0_1 = arith.constant 0 : index
    %1 = vector.load %arg7[%c0, %c0_0, %c0_1] : memref<20x20x8xf32, #tpu.memory_space<vmem>>, vector<20x20x8xf32>
    tpu.vector_store %arg7[%c0, %c0_0, %c0_1], %0 {strides = array<i32>} : memref<20x20x8xf32, #tpu.memory_space<vmem>>, vector<20x20x8xf32>,
    %c0_2 = arith.constant 0 : index
    %c0_3 = arith.constant 0 : index
    %c0_4 = arith.constant 0 : index
    %c0_5 = arith.constant 0 : index
    %2 = vector.load %arg1[%c0_2, %c0_3, %c0_4, %c0_5] : memref<1x16x16x8xbf16, #tpu.memory_space<vmem>>, vector<1x16x16x8xbf16>
    %3 = vector.shape_cast %2 : vector<1x16x16x8xbf16> to vector<16x16x8xbf16>
    %4 = arith.extf %3 : vector<16x16x8xbf16> to vector<16x16x8xf32>
    %cst_6 = arith.constant 0.000000e+00 : f32
    %5 = vector.broadcast %cst_6 : f32 to vector<16x16x8xf32>
    %6 = arith.maximumf %4, %5 : vector<16x16x8xf32>
    %c2 = arith.constant 2 : index
    %c2_7 = arith.constant 2 : index
    %c0_8 = arith.constant 0 : index
    %7 = vector.load %arg7[%c2, %c2_7, %c0_8] : memref<20x20x8xf32, #tpu.memory_space<vmem>>, vector<16x16x8xf32>
    tpu.vector_store %arg7[%c2, %c2_7, %c0_8], %6 {strides = array<i32>} : memref<20x20x8xf32, #tpu.memory_space<vmem>>, vector<16x16x8xf32>,
    %c0_9 = arith.constant 0 : index
    %c0_10 = arith.constant 0 : index
    %c0_11 = arith.constant 0 : index
    %8 = vector.load %arg7[%c0_9, %c0_10, %c0_11] : memref<20x20x8xf32, #tpu.memory_space<vmem>>, vector<20x20x8xf32>
    %c0_12 = arith.constant 0 : index
    %c0_13 = arith.constant 0 : index
    %9 = vector.load %arg2[%c0_12, %c0_13] : memref<9x8xf32, #tpu.memory_space<vmem>>, vector<9x8xf32>
    %cst_14 = arith.constant 0.000000e+00 : f32
    %10 = vector.broadcast %cst_14 : f32 to vector<16x16x8xf32>
    %11 = vector.extract_strided_slice %8 {offsets = [0, 0, 0], sizes = [16, 16, 8], strides = [1, 1, 1]} : vector<20x20x8xf32> to vector<16x16x8xf32>
    %12 = vector.extract_strided_slice %9 {offsets = [0, 0], sizes = [1, 8], strides = [1, 1]} : vector<9x8xf32> to vector<1x8xf32>
    %13 = vector.shape_cast %12 : vector<1x8xf32> to vector<8xf32>
    %14 = vector.shape_cast %13 : vector<8xf32> to vector<1x1x8xf32>
    %15 = vector.broadcast %14 : vector<1x1x8xf32> to vector<16x16x8xf32>
    %16 = arith.mulf %11, %15 : vector<16x16x8xf32>
    %17 = arith.addf %10, %16 : vector<16x16x8xf32>
    %18 = vector.extract_strided_slice %8 {offsets = [0, 2, 0], sizes = [16, 16, 8], strides = [1, 1, 1]} : vector<20x20x8xf32> to vector<16x16x8xf32>
    %19 = vector.extract_strided_slice %9 {offsets = [1, 0], sizes = [1, 8], strides = [1, 1]} : vector<9x8xf32> to vector<1x8xf32>
    %20 = vector.shape_cast %19 : vector<1x8xf32> to vector<8xf32>
    %21 = vector.shape_cast %20 : vector<8xf32> to vector<1x1x8xf32>
    %22 = vector.broadcast %21 : vector<1x1x8xf32> to vector<16x16x8xf32>
    %23 = arith.mulf %18, %22 : vector<16x16x8xf32>
    %24 = arith.addf %17, %23 : vector<16x16x8xf32>
    %25 = vector.extract_strided_slice %8 {offsets = [0, 4, 0], sizes = [16, 16, 8], strides = [1, 1, 1]} : vector<20x20x8xf32> to vector<16x16x8xf32>
    %26 = vector.extract_strided_slice %9 {offsets = [2, 0], sizes = [1, 8], strides = [1, 1]} : vector<9x8xf32> to vector<1x8xf32>
    %27 = vector.shape_cast %26 : vector<1x8xf32> to vector<8xf32>
    %28 = vector.shape_cast %27 : vector<8xf32> to vector<1x1x8xf32>
    %29 = vector.broadcast %28 : vector<1x1x8xf32> to vector<16x16x8xf32>
    %30 = arith.mulf %25, %29 : vector<16x16x8xf32>
    %31 = arith.addf %24, %30 : vector<16x16x8xf32>
    %32 = vector.extract_strided_slice %8 {offsets = [2, 0, 0], sizes = [16, 16, 8], strides = [1, 1, 1]} : vector<20x20x8xf32> to vector<16x16x8xf32>
    %33 = vector.extract_strided_slice %9 {offsets = [3, 0], sizes = [1, 8], strides = [1, 1]} : vector<9x8xf32> to vector<1x8xf32>
    %34 = vector.shape_cast %33 : vector<1x8xf32> to vector<8xf32>
    %35 = vector.shape_cast %34 : vector<8xf32> to vector<1x1x8xf32>
    %36 = vector.broadcast %35 : vector<1x1x8xf32> to vector<16x16x8xf32>
    %37 = arith.mulf %32, %36 : vector<16x16x8xf32>
    %38 = arith.addf %31, %37 : vector<16x16x8xf32>
    %39 = vector.extract_strided_slice %8 {offsets = [2, 2, 0], sizes = [16, 16, 8], strides = [1, 1, 1]} : vector<20x20x8xf32> to vector<16x16x8xf32>
    %40 = vector.extract_strided_slice %9 {offsets = [4, 0], sizes = [1, 8], strides = [1, 1]} : vector<9x8xf32> to vector<1x8xf32>
    %41 = vector.shape_cast %40 : vector<1x8xf32> to vector<8xf32>
    %42 = vector.shape_cast %41 : vector<8xf32> to vector<1x1x8xf32>
    %43 = vector.broadcast %42 : vector<1x1x8xf32> to vector<16x16x8xf32>
    %44 = arith.mulf %39, %43 : vector<16x16x8xf32>
    %45 = arith.addf %38, %44 : vector<16x16x8xf32>
    %46 = vector.extract_strided_slice %8 {offsets = [2, 4, 0], sizes = [16, 16, 8], strides = [1, 1, 1]} : vector<20x20x8xf32> to vector<16x16x8xf32>
    %47 = vector.extract_strided_slice %9 {offsets = [5, 0], sizes = [1, 8], strides = [1, 1]} : vector<9x8xf32> to vector<1x8xf32>
    %48 = vector.shape_cast %47 : vector<1x8xf32> to vector<8xf32>
    %49 = vector.shape_cast %48 : vector<8xf32> to vector<1x1x8xf32>
    %50 = vector.broadcast %49 : vector<1x1x8xf32> to vector<16x16x8xf32>
    %51 = arith.mulf %46, %50 : vector<16x16x8xf32>
    %52 = arith.addf %45, %51 : vector<16x16x8xf32>
    %53 = vector.extract_strided_slice %8 {offsets = [4, 0, 0], sizes = [16, 16, 8], strides = [1, 1, 1]} : vector<20x20x8xf32> to vector<16x16x8xf32>
    %54 = vector.extract_strided_slice %9 {offsets = [6, 0], sizes = [1, 8], strides = [1, 1]} : vector<9x8xf32> to vector<1x8xf32>
    %55 = vector.shape_cast %54 : vector<1x8xf32> to vector<8xf32>
    %56 = vector.shape_cast %55 : vector<8xf32> to vector<1x1x8xf32>
    %57 = vector.broadcast %56 : vector<1x1x8xf32> to vector<16x16x8xf32>
    %58 = arith.mulf %53, %57 : vector<16x16x8xf32>
    %59 = arith.addf %52, %58 : vector<16x16x8xf32>
    %60 = vector.extract_strided_slice %8 {offsets = [4, 2, 0], sizes = [16, 16, 8], strides = [1, 1, 1]} : vector<20x20x8xf32> to vector<16x16x8xf32>
    %61 = vector.extract_strided_slice %9 {offsets = [7, 0], sizes = [1, 8], strides = [1, 1]} : vector<9x8xf32> to vector<1x8xf32>
    %62 = vector.shape_cast %61 : vector<1x8xf32> to vector<8xf32>
    %63 = vector.shape_cast %62 : vector<8xf32> to vector<1x1x8xf32>
    %64 = vector.broadcast %63 : vector<1x1x8xf32> to vector<16x16x8xf32>
    %65 = arith.mulf %60, %64 : vector<16x16x8xf32>
    %66 = arith.addf %59, %65 : vector<16x16x8xf32>
    %67 = vector.extract_strided_slice %8 {offsets = [4, 4, 0], sizes = [16, 16, 8], strides = [1, 1, 1]} : vector<20x20x8xf32> to vector<16x16x8xf32>
    %68 = vector.extract_strided_slice %9 {offsets = [8, 0], sizes = [1, 8], strides = [1, 1]} : vector<9x8xf32> to vector<1x8xf32>
    %69 = vector.shape_cast %68 : vector<1x8xf32> to vector<8xf32>
    %70 = vector.shape_cast %69 : vector<8xf32> to vector<1x1x8xf32>
    %71 = vector.broadcast %70 : vector<1x1x8xf32> to vector<16x16x8xf32>
    %72 = arith.mulf %67, %71 : vector<16x16x8xf32>
    %73 = arith.addf %66, %72 : vector<16x16x8xf32>
    %74 = vector.shape_cast %73 : vector<16x16x8xf32> to vector<256x8xf32>
    %75 = arith.truncf %74 : vector<256x8xf32> to vector<256x8xbf16>
    %c0_15 = arith.constant 0 : index
    %c0_16 = arith.constant 0 : index
    %76 = vector.load %arg3[%c0_15, %c0_16] : memref<8x8xbf16, #tpu.memory_space<vmem>>, vector<8x8xbf16>
    %cst_17 = arith.constant dense<0.000000e+00> : vector<8x256xf32>
    %77 = tpu.matmul %76, %75, %cst_17 {dimension_numbers = #tpu.dot_dimension_numbers<[1], [1], [0], [0], [0, 0, 1, 0], [], []>} : vector<8x8xbf16>, vector<256x8xbf16>, vector<8x256xf32> -> vector<8x256xf32>
    %c0_18 = arith.constant 0 : index
    %c0_19 = arith.constant 0 : index
    %c0_20 = arith.constant 0 : index
    %78 = vector.load %arg4[%c0_18, %c0_19, %c0_20] : memref<1x8x256xf32, #tpu.memory_space<vmem>>, vector<1x8x256xf32>
    %79 = vector.shape_cast %78 : vector<1x8x256xf32> to vector<8x256xf32>
    %80 = vector.shape_cast %77 : vector<8x256xf32> to vector<1x8x256xf32>
    tpu.vector_store %arg4[%c0_18, %c0_19, %c0_20], %80 {strides = array<i32>} : memref<1x8x256xf32, #tpu.memory_space<vmem>>, vector<1x8x256xf32>,
    %cst_21 = arith.constant dense<0.000000e+00> : vector<8xf32>
    %81 = vector.multi_reduction <add>, %77, %cst_21 [1] : vector<8x256xf32> to vector<8xf32>
    %82 = vector.shape_cast %81 : vector<8xf32> to vector<8x1xf32>
    %c0_22 = arith.constant 0 : index
    %c0_23 = arith.constant 0 : index
    %c0_24 = arith.constant 0 : index
    %83 = vector.load %arg5[%c0_22, %c0_23, %c0_24] : memref<1x8x1xf32, #tpu.memory_space<vmem>>, vector<1x8x1xf32>
    %84 = vector.shape_cast %83 : vector<1x8x1xf32> to vector<8x1xf32>
    %85 = vector.shape_cast %82 : vector<8x1xf32> to vector<1x8x1xf32>
    tpu.vector_store %arg5[%c0_22, %c0_23, %c0_24], %85 {strides = array<i32>} : memref<1x8x1xf32, #tpu.memory_space<vmem>>, vector<1x8x1xf32>,
    %86 = arith.mulf %77, %77 : vector<8x256xf32>
    %cst_25 = arith.constant dense<0.000000e+00> : vector<8xf32>
    %87 = vector.multi_reduction <add>, %86, %cst_25 [1] : vector<8x256xf32> to vector<8xf32>
    %88 = vector.shape_cast %87 : vector<8xf32> to vector<8x1xf32>
    %c0_26 = arith.constant 0 : index
    %c0_27 = arith.constant 0 : index
    %c0_28 = arith.constant 0 : index
    %89 = vector.load %arg6[%c0_26, %c0_27, %c0_28] : memref<1x8x1xf32, #tpu.memory_space<vmem>>, vector<1x8x1xf32>
    %90 = vector.shape_cast %89 : vector<1x8x1xf32> to vector<8x1xf32>
    %91 = vector.shape_cast %88 : vector<8x1xf32> to vector<1x8x1xf32>
    tpu.vector_store %arg6[%c0_26, %c0_27, %c0_28], %91 {strides = array<i32>} : memref<1x8x1xf32, #tpu.memory_space<vmem>>, vector<1x8x1xf32>,
    return
  }
  func.func @transform_0(%arg0: i32) -> (i32, i32, i32, i32) {
    %c0_i32 = arith.constant 0 : i32
    %c0_i32_0 = arith.constant 0 : i32
    %c0_i32_1 = arith.constant 0 : i32
    %c0_i32_2 = arith.constant 0 : i32
    return %arg0, %c0_i32, %c0_i32_0, %c0_i32_1 : i32, i32, i32, i32
  }
  func.func @transform_1(%arg0: i32) -> (i32, i32) {
    %c0_i32 = arith.constant 0 : i32
    %c0_i32_0 = arith.constant 0 : i32
    %c0_i32_1 = arith.constant 0 : i32
    return %c0_i32, %c0_i32_0 : i32, i32
  }
  func.func @transform_2(%arg0: i32) -> (i32, i32) {
    %c0_i32 = arith.constant 0 : i32
    %c0_i32_0 = arith.constant 0 : i32
    %c0_i32_1 = arith.constant 0 : i32
    return %c0_i32, %c0_i32_0 : i32, i32
  }
  func.func @transform_3(%arg0: i32) -> (i32, i32, i32) {
    %c0_i32 = arith.constant 0 : i32
    %c0_i32_0 = arith.constant 0 : i32
    %c0_i32_1 = arith.constant 0 : i32
    return %arg0, %c0_i32, %c0_i32_0 : i32, i32, i32
  }
  func.func @transform_4(%arg0: i32) -> (i32, i32, i32) {
    %c0_i32 = arith.constant 0 : i32
    %c0_i32_0 = arith.constant 0 : i32
    %c0_i32_1 = arith.constant 0 : i32
    return %arg0, %c0_i32, %c0_i32_0 : i32, i32, i32
  }
  func.func @transform_5(%arg0: i32) -> (i32, i32, i32) {
    %c0_i32 = arith.constant 0 : i32
    %c0_i32_0 = arith.constant 0 : i32
    %c0_i32_1 = arith.constant 0 : i32
    return %arg0, %c0_i32, %c0_i32_0 : i32, i32, i32
  }
}

</mosaic_0001>

<llo_original>
// kernel: tpu_custom_call.1
$region0: #{tpu_custom_call.1}
  #allocation0 [shape = 'u32[]', space=smem, size = 0x4, offset = 0x4, fixed_abs, tag = 'smem constant byte address 0x4 - core index']
  #allocation1 [shape = 'u32[144,128]{1,0:T(1,128)}', space=vmem, size = 0x12000, scoped, tag = 'internal scratch']
  #allocation2 [shape = 'f32[20,20,8]{2,1,0:T(8,128)}', space=vmem, size = 0x3c000, scoped, tag = 'scratch operand']
  %s0 = inlined_call_operand.vmem [shape: bf16[2,16,16,8], index: 0, kind: input, shape index: {}]
  %s1 = inlined_call_operand.vmem [shape: f32[9,8], index: 1, kind: input, shape index: {}]
  %s2 = inlined_call_operand.vmem [shape: bf16[8,8], index: 2, kind: input, shape index: {}]
  %s3 = inlined_call_operand.hbm [shape: f32[2,8,256], index: 3, kind: output, shape index: {0}]
  %s4 = inlined_call_operand.vmem [shape: f32[2,8,1], index: 4, kind: output, shape index: {1}]
  %s5 = inlined_call_operand.vmem [shape: f32[2,8,1], index: 5, kind: output, shape index: {2}]
  %6 = xla_tuple %s3, %s4, %s5
  %s7 = sld [smem:[#allocation0]]
  $region61: #{tpu_custom_call.1} parent=0
    _
  %s9 = ssub.s32 1, %s7
  %s10 = scalar_select 0, %s9, %s7
  $region1: #{tpu_custom_call.1} parent=0
    #allocation3 [shape = 'u8[16384]{0}', space=vmem, size = 0x4000, scoped, tag = 'output window, operand 0']
    #allocation4 [shape = 's32[2]{0}', space=sflag, size = 0x8, scoped, tag = 'scoped memory for tpu_custom_call.1']
    %11 = vsyncpa [#allocation4], 0
    %s12 = scalar_lea.sflag [#allocation4], 1
    %13 = vsyncpa %s12, 0
    loop: start=0, step=1, limit=4
    $region2: #{tpu_custom_call.1} parent=1 // loop_pre_header
      _
    $region3: #{tpu_custom_call.1} parent=1 // loop_header
      %s15 = sphi 0, %s19
      %p16 = scmp.ge.s32.totalorder %s15, 4
      %s25 = sphi 0, %s27
      %s28 = sphi 0, %s25
      %s29 = sphi 0, %s28
      %s45 = sphi 0, %s29
      %s49 = sphi 0, %s49
      %s51 = sphi 0, %s49
      %s52 = sphi 0, %s51
      %s66 = sphi 0, %s52
      %s70 = sphi 0, %s70
      %s72 = sphi 0, %s70
      %s73 = sphi 0, %s72
      %s87 = sphi 0, %s73
      %s93 = sphi 0, %s95
      %s96 = sphi 0, %s93
      %s97 = sphi 0, %s96
      %s113 = sphi 0, %s97
      %s119 = sphi 0, %s121
      %s122 = sphi 0, %s119
      %s123 = sphi 0, %s122
      %s139 = sphi 0, %s123
      %s145 = sphi 0, %s147
      %s148 = sphi 0, %s145
      %s149 = sphi 0, %s148
      %s165 = sphi 0, %s149
    $region4: #{tpu_custom_call.1} parent=1 // loop_header_branch
      %18 = sbr.rel (%p16) target = $region8
    $region5: #{tpu_custom_call.1} parent=1 // loop_body
      %s20 = ssub.s32 %s15, 1
      %s21 = ssub.s32 %s15, 2
      %s22 = sadd.s32 %s15, 1
      %s23 = ssub.s32 %s15, %s22
      %p24 = scmp.eq.s32.totalorder %s23, 0
      %s26 = sadd.s32 %s25, 1
      %s27 = scalar_select %p24, %s25, %s26
      %p30 = pneg %p24
      %p31 = scmp.eq.s32.totalorder %s15, 1
      %p32 = por %p30, %p31
      %p33 = scmp.ne.s32.totalorder %s25, %s28
      %p34 = scmp.eq.s32.totalorder %s15, 0
      %p35 = por %p33, %p34
      %p36 = scmp.ne.s32.totalorder %s25, %s28
      %p37 = scmp.eq.s32.totalorder %s20, 1
      %p38 = por %p36, %p37
      %p39 = scmp.ne.s32.totalorder %s28, %s29
      %p40 = scmp.eq.s32.totalorder %s20, 0
      %p41 = por %p39, %p40
      %p42 = scmp.ne.s32.totalorder %s28, %s29
      %p43 = scmp.eq.s32.totalorder %s21, 1
      %p44 = por %p42, %p43
      %p46 = scmp.ne.s32.totalorder %s29, %s45
      %p47 = scmp.eq.s32.totalorder %s21, 0
      %p48 = por %p46, %p47
      %s50 = sadd.s32 %s49, 1
      %p53 = scmp.eq.s32.totalorder %s15, 1
      %p54 = scmp.ne.s32.totalorder %s49, %s51
      %p55 = scmp.eq.s32.totalorder %s15, 0
      %p56 = por %p54, %p55
      %p57 = scmp.ne.s32.totalorder %s49, %s51
      %p58 = scmp.eq.s32.totalorder %s20, 1
      %p59 = por %p57, %p58
      %p60 = scmp.ne.s32.totalorder %s51, %s52
      %p61 = scmp.eq.s32.totalorder %s20, 0
      %p62 = por %p60, %p61
      %p63 = scmp.ne.s32.totalorder %s51, %s52
      %p64 = scmp.eq.s32.totalorder %s21, 1
      %p65 = por %p63, %p64
      %p67 = scmp.ne.s32.totalorder %s52, %s66
      %p68 = scmp.eq.s32.totalorder %s21, 0
      %p69 = por %p67, %p68
      %s71 = sadd.s32 %s70, 1
      %p74 = scmp.eq.s32.totalorder %s15, 1
      %p75 = scmp.ne.s32.totalorder %s70, %s72
      %p76 = scmp.eq.s32.totalorder %s15, 0
      %p77 = por %p75, %p76
      %p78 = scmp.ne.s32.totalorder %s70, %s72
      %p79 = scmp.eq.s32.totalorder %s20, 1
      %p80 = por %p78, %p79
      %p81 = scmp.ne.s32.totalorder %s72, %s73
      %p82 = scmp.eq.s32.totalorder %s20, 0
      %p83 = por %p81, %p82
      %p84 = scmp.ne.s32.totalorder %s72, %s73
      %p85 = scmp.eq.s32.totalorder %s21, 1
      %p86 = por %p84, %p85
      %p88 = scmp.ne.s32.totalorder %s73, %s87
      %p89 = scmp.eq.s32.totalorder %s21, 0
      %p90 = por %p88, %p89
      %s91 = ssub.s32 %s15, %s22
      %p92 = scmp.eq.s32.totalorder %s91, 0
      %s94 = sadd.s32 %s93, 1
      %s95 = scalar_select %p92, %s93, %s94
      %p98 = pneg %p92
      %p99 = scmp.eq.s32.totalorder %s15, 1
      %p100 = por %p98, %p99
      %p101 = scmp.ne.s32.totalorder %s93, %s96
      %p102 = scmp.eq.s32.totalorder %s15, 0
      %p103 = por %p101, %p102
      %p104 = scmp.ne.s32.totalorder %s93, %s96
      %p105 = scmp.eq.s32.totalorder %s20, 1
      %p106 = por %p104, %p105
      %p107 = scmp.ne.s32.totalorder %s96, %s97
      %p108 = scmp.eq.s32.totalorder %s20, 0
      %p109 = por %p107, %p108
      %p110 = scmp.ne.s32.totalorder %s96, %s97
      %p111 = scmp.eq.s32.totalorder %s21, 1
      %p112 = por %p110, %p111
      %p114 = scmp.ne.s32.totalorder %s97, %s113
      %p115 = scmp.eq.s32.totalorder %s21, 0
      %p116 = por %p114, %p115
      %s117 = ssub.s32 %s15, %s22
      %p118 = scmp.eq.s32.totalorder %s117, 0
      %s120 = sadd.s32 %s119, 1
      %s121 = scalar_select %p118, %s119, %s120
      %p124 = pneg %p118
      %p125 = scmp.eq.s32.totalorder %s15, 1
      %p126 = por %p124, %p125
      %p127 = scmp.ne.s32.totalorder %s119, %s122
      %p128 = scmp.eq.s32.totalorder %s15, 0
      %p129 = por %p127, %p128
      %p130 = scmp.ne.s32.totalorder %s119, %s122
      %p131 = scmp.eq.s32.totalorder %s20, 1
      %p132 = por %p130, %p131
      %p133 = scmp.ne.s32.totalorder %s122, %s123
      %p134 = scmp.eq.s32.totalorder %s20, 0
      %p135 = por %p133, %p134
      %p136 = scmp.ne.s32.totalorder %s122, %s123
      %p137 = scmp.eq.s32.totalorder %s21, 1
      %p138 = por %p136, %p137
      %p140 = scmp.ne.s32.totalorder %s123, %s139
      %p141 = scmp.eq.s32.totalorder %s21, 0
      %p142 = por %p140, %p141
      %s143 = ssub.s32 %s15, %s22
      %p144 = scmp.eq.s32.totalorder %s143, 0
      %s146 = sadd.s32 %s145, 1
      %s147 = scalar_select %p144, %s145, %s146
      %p150 = pneg %p144
      %p151 = scmp.eq.s32.totalorder %s15, 1
      %p152 = por %p150, %p151
      %p153 = scmp.ne.s32.totalorder %s145, %s148
      %p154 = scmp.eq.s32.totalorder %s15, 0
      %p155 = por %p153, %p154
      %p156 = scmp.ne.s32.totalorder %s145, %s148
      %p157 = scmp.eq.s32.totalorder %s20, 1
      %p158 = por %p156, %p157
      %p159 = scmp.ne.s32.totalorder %s148, %s149
      %p160 = scmp.eq.s32.totalorder %s20, 0
      %p161 = por %p159, %p160
      %p162 = scmp.ne.s32.totalorder %s148, %s149
      %p163 = scmp.eq.s32.totalorder %s21, 1
      %p164 = por %p162, %p163
      %p166 = scmp.ne.s32.totalorder %s149, %s165
      %p167 = scmp.eq.s32.totalorder %s21, 0
      %p168 = por %p166, %p167
      %p169 = scmp.le.s32.totalorder 1, %s15
      %p170 = scmp.lt.s32.totalorder %s15, 3
      %p171 = pnand %p169, %p170
      %p172 = pneg %p171
      // Predicated region
      $region9: #{tpu_custom_call.1} parent=5 // pred_check
        _
      $region10: #{tpu_custom_call.1} parent=5 // pred_check_branch
        %174 = sbr.rel (%p171) target = $region12
      $region11: #{tpu_custom_call.1} parent=5 // pred_region
        %s175 = ssub.s32 %s15, 1
        // Predicated region
        $region13: #{tpu_custom_call.1} parent=11 // pred_check
          %p176 = pneg %p62
        $region14: #{tpu_custom_call.1} parent=11 // pred_check_branch
          %178 = sbr.rel (%p176) target = $region16
        $region15: #{tpu_custom_call.1} parent=11 // pred_region
          _
        $region16: #{tpu_custom_call.1} parent=11 // pred_fallthru
          _
        // Predicated region
        $region17: #{tpu_custom_call.1} parent=11 // pred_check
          %p179 = pneg %p83
        $region18: #{tpu_custom_call.1} parent=11 // pred_check_branch
          %181 = sbr.rel (%p179) target = $region20
        $region19: #{tpu_custom_call.1} parent=11 // pred_region
          _
        $region20: #{tpu_custom_call.1} parent=11 // pred_fallthru
          _
      $region12: #{tpu_custom_call.1} parent=5 // pred_fallthru
        _
      %p182 = scmp.lt.s32.totalorder %s15, 2
      // Predicated region
      $region21: #{tpu_custom_call.1} parent=5 // pred_check
        %p183 = pneg %p182
      $region22: #{tpu_custom_call.1} parent=5 // pred_check_branch
        %185 = sbr.rel (%p183) target = $region24
      $region23: #{tpu_custom_call.1} parent=5 // pred_region
        // Predicated region
        $region25: #{tpu_custom_call.1} parent=23 // pred_check
          %p186 = pneg %p35
        $region26: #{tpu_custom_call.1} parent=23 // pred_check_branch
          %188 = sbr.rel (%p186) target = $region28
        $region27: #{tpu_custom_call.1} parent=23 // pred_region
          %p189 = scmp.lt.s32.totalorder %s15, 1
          %s190 = scalar_select %p189, %s15, 1
          %s191 = smul.addr %s190, 32
          %s192 = smul.addr %s191, 4
          %s193 = scalar_lea.vmem %s0, %s192
        $region28: #{tpu_custom_call.1} parent=23 // pred_fallthru
          _
      $region24: #{tpu_custom_call.1} parent=5 // pred_fallthru
        _
      %p194 = scmp.le.s32.totalorder 1, %s15
      %p195 = scmp.lt.s32.totalorder %s15, 3
      %p196 = pnand %p194, %p195
      %p197 = pneg %p196
      // Predicated region
      $region29: #{tpu_custom_call.1} parent=5 // pred_check
        _
      $region30: #{tpu_custom_call.1} parent=5 // pred_check_branch
        %199 = sbr.rel (%p196) target = $region32
      $region31: #{tpu_custom_call.1} parent=5 // pred_region
        %s200 = ssub.s32 %s15, 1
        %p201 = scmp.lt.s32.totalorder %s20, 1
        %s202 = scalar_select %p201, %s20, 1
        %s203 = smul.addr %s202, 32
        %s204 = smul.addr %s203, 4
        %s205 = scalar_lea.vmem %s0, %s204
        %p206 = pneg %p41
        %p207 = pneg %p38
        %p208 = pneg %p62
        %p209 = pneg %p59
        %p210 = pneg %p83
        %p211 = pneg %p80
        %p212 = pneg %p109
        %p213 = pneg %p106
        %s214 = sand.u32 %s96, 1
        %s215 = scalar_lea.sflag [#allocation4], %s214
        %s216 = sand.u32 %s96, 1
        %s217 = smul.addr %s216, 16
        %s218 = scalar_lea.vmem [#allocation3], %s217
        %p219 = pneg %p135
        %p220 = pneg %p132
        %p221 = scmp.lt.s32.totalorder %s20, 1
        %s222 = scalar_select %p221, %s20, 1
        %s223 = smul.addr %s222, 8
        %s224 = scalar_lea.vmem %s4, %s223
        %p225 = pneg %p161
        %p226 = pneg %p158
        %p227 = scmp.lt.s32.totalorder %s20, 1
        %s228 = scalar_select %p227, %s20, 1
        %s229 = smul.addr %s228, 8
        %s230 = scalar_lea.vmem %s5, %s229
        %p231 = scmp.lt.s32.totalorder %s20, 1
        %s232 = scalar_select %p231, %s20, 1
        %s233 = smul.addr %s232, 32
        %s234 = smul.addr %s233, 4
        %s235 = scalar_lea.vmem %s0, %s234
        %p236 = scmp.lt.s32.totalorder %s20, 1
        %s237 = scalar_select %p236, %s20, 1
        %s238 = smul.addr %s237, 8
        %s239 = scalar_lea.vmem %s4, %s238
        %p240 = scmp.lt.s32.totalorder %s20, 1
        %s241 = scalar_select %p240, %s20, 1
        %s242 = smul.addr %s241, 8
        %s243 = scalar_lea.vmem %s5, %s242
        %vm245 = vcmask 64512
        %246 = vst.msk [vmem:[#allocation2] sm:$0xff] %vm245, 0.0
        %247 = vst.msk [vmem:[#allocation2 + $0x8] sm:$0xff] %vm245, 0.0
        %vm248 = vcmask 60416
        %249 = vst.msk [vmem:[#allocation2 + $0x10] sm:$0xf] %vm248, 0.0
        %250 = vst.msk [vmem:[#allocation2 + $0x18] sm:$0xff] %vm245, 0.0
        %251 = vst.msk [vmem:[#allocation2 + $0x20] sm:$0xff] %vm245, 0.0
        %252 = vst.msk [vmem:[#allocation2 + $0x28] sm:$0xf] %vm248, 0.0
        %253 = vst.msk [vmem:[#allocation2 + $0x30] sm:$0xff] %vm245, 0.0
        %254 = vst.msk [vmem:[#allocation2 + $0x38] sm:$0xff] %vm245, 0.0
        %255 = vst.msk [vmem:[#allocation2 + $0x40] sm:$0xf] %vm248, 0.0
        %256 = vst.msk [vmem:[#allocation2 + $0x48] sm:$0xff] %vm245, 0.0
        %257 = vst.msk [vmem:[#allocation2 + $0x50] sm:$0xff] %vm245, 0.0
        %258 = vst.msk [vmem:[#allocation2 + $0x58] sm:$0xf] %vm248, 0.0
        %259 = vst.msk [vmem:[#allocation2 + $0x60] sm:$0xff] %vm245, 0.0
        %260 = vst.msk [vmem:[#allocation2 + $0x68] sm:$0xff] %vm245, 0.0
        %261 = vst.msk [vmem:[#allocation2 + $0x70] sm:$0xf] %vm248, 0.0
        %262 = vst.msk [vmem:[#allocation2 + $0x78] sm:$0xff] %vm245, 0.0
        %263 = vst.msk [vmem:[#allocation2 + $0x80] sm:$0xff] %vm245, 0.0
        %264 = vst.msk [vmem:[#allocation2 + $0x88] sm:$0xf] %vm248, 0.0
        %265 = vst.msk [vmem:[#allocation2 + $0x90] sm:$0xff] %vm245, 0.0
        %266 = vst.msk [vmem:[#allocation2 + $0x98] sm:$0xff] %vm245, 0.0
        %267 = vst.msk [vmem:[#allocation2 + $0xa0] sm:$0xf] %vm248, 0.0
        %268 = vst.msk [vmem:[#allocation2 + $0xa8] sm:$0xff] %vm245, 0.0
        %269 = vst.msk [vmem:[#allocation2 + $0xb0] sm:$0xff] %vm245, 0.0
        %270 = vst.msk [vmem:[#allocation2 + $0xb8] sm:$0xf] %vm248, 0.0
        %271 = vst.msk [vmem:[#allocation2 + $0xc0] sm:$0xff] %vm245, 0.0
        %272 = vst.msk [vmem:[#allocation2 + $0xc8] sm:$0xff] %vm245, 0.0
        %273 = vst.msk [vmem:[#allocation2 + $0xd0] sm:$0xf] %vm248, 0.0
        %274 = vst.msk [vmem:[#allocation2 + $0xd8] sm:$0xff] %vm245, 0.0
        %275 = vst.msk [vmem:[#allocation2 + $0xe0] sm:$0xff] %vm245, 0.0
        %276 = vst.msk [vmem:[#allocation2 + $0xe8] sm:$0xf] %vm248, 0.0
        %277 = vst.msk [vmem:[#allocation2 + $0xf0] sm:$0xff] %vm245, 0.0
        %278 = vst.msk [vmem:[#allocation2 + $0xf8] sm:$0xff] %vm245, 0.0
        %279 = vst.msk [vmem:[#allocation2 + $0x100] sm:$0xf] %vm248, 0.0
        %280 = vst.msk [vmem:[#allocation2 + $0x108] sm:$0xff] %vm245, 0.0
        %281 = vst.msk [vmem:[#allocation2 + $0x110] sm:$0xff] %vm245, 0.0
        %282 = vst.msk [vmem:[#allocation2 + $0x118] sm:$0xf] %vm248, 0.0
        %283 = vst.msk [vmem:[#allocation2 + $0x120] sm:$0xff] %vm245, 0.0
        %284 = vst.msk [vmem:[#allocation2 + $0x128] sm:$0xff] %vm245, 0.0
        %285 = vst.msk [vmem:[#allocation2 + $0x130] sm:$0xf] %vm248, 0.0
        %286 = vst.msk [vmem:[#allocation2 + $0x138] sm:$0xff] %vm245, 0.0
        %287 = vst.msk [vmem:[#allocation2 + $0x140] sm:$0xff] %vm245, 0.0
        %288 = vst.msk [vmem:[#allocation2 + $0x148] sm:$0xf] %vm248, 0.0
        %289 = vst.msk [vmem:[#allocation2 + $0x150] sm:$0xff] %vm245, 0.0
        %290 = vst.msk [vmem:[#allocation2 + $0x158] sm:$0xff] %vm245, 0.0
        %291 = vst.msk [vmem:[#allocation2 + $0x160] sm:$0xf] %vm248, 0.0
        %292 = vst.msk [vmem:[#allocation2 + $0x168] sm:$0xff] %vm245, 0.0
        %293 = vst.msk [vmem:[#allocation2 + $0x170] sm:$0xff] %vm245, 0.0
        %294 = vst.msk [vmem:[#allocation2 + $0x178] sm:$0xf] %vm248, 0.0
        %295 = vst.msk [vmem:[#allocation2 + $0x180] sm:$0xff] %vm245, 0.0
        %296 = vst.msk [vmem:[#allocation2 + $0x188] sm:$0xff] %vm245, 0.0
        %297 = vst.msk [vmem:[#allocation2 + $0x190] sm:$0xf] %vm248, 0.0
        %298 = vst.msk [vmem:[#allocation2 + $0x198] sm:$0xff] %vm245, 0.0
        %299 = vst.msk [vmem:[#allocation2 + $0x1a0] sm:$0xff] %vm245, 0.0
        %300 = vst.msk [vmem:[#allocation2 + $0x1a8] sm:$0xf] %vm248, 0.0
        %301 = vst.msk [vmem:[#allocation2 + $0x1b0] sm:$0xff] %vm245, 0.0
        %302 = vst.msk [vmem:[#allocation2 + $0x1b8] sm:$0xff] %vm245, 0.0
        %303 = vst.msk [vmem:[#allocation2 + $0x1c0] sm:$0xf] %vm248, 0.0
        %304 = vst.msk [vmem:[#allocation2 + $0x1c8] sm:$0xff] %vm245, 0.0
        %305 = vst.msk [vmem:[#allocation2 + $0x1d0] sm:$0xff] %vm245, 0.0
        %306 = vst.msk [vmem:[#allocation2 + $0x1d8] sm:$0xf] %vm248, 0.0
        %v307 = vld [vmem:[%s235] sm:$0xf]
        %v308 = vld [vmem:[%s235 + $0x4] sm:$0xf]
        %v309 = vld [vmem:[%s235 + $0x8] sm:$0xf]
        %v310 = vld [vmem:[%s235 + $0xc] sm:$0xf]
        %v311 = vld [vmem:[%s235 + $0x10] sm:$0xf]
        %v312 = vld [vmem:[%s235 + $0x14] sm:$0xf]
        %v313 = vld [vmem:[%s235 + $0x18] sm:$0xf]
        %v314 = vld [vmem:[%s235 + $0x1c] sm:$0xf]
        %v315 = vld [vmem:[%s235 + $0x20] sm:$0xf]
        %v316 = vld [vmem:[%s235 + $0x24] sm:$0xf]
        %v317 = vld [vmem:[%s235 + $0x28] sm:$0xf]
        %v318 = vld [vmem:[%s235 + $0x2c] sm:$0xf]
        %v319 = vld [vmem:[%s235 + $0x30] sm:$0xf]
        %v320 = vld [vmem:[%s235 + $0x34] sm:$0xf]
        %v321 = vld [vmem:[%s235 + $0x38] sm:$0xf]
        %v322 = vld [vmem:[%s235 + $0x3c] sm:$0xf]
        %v323 = vld [vmem:[%s235 + $0x40] sm:$0xf]
        %v324 = vld [vmem:[%s235 + $0x44] sm:$0xf]
        %v325 = vld [vmem:[%s235 + $0x48] sm:$0xf]
        %v326 = vld [vmem:[%s235 + $0x4c] sm:$0xf]
        %v327 = vld [vmem:[%s235 + $0x50] sm:$0xf]
        %v328 = vld [vmem:[%s235 + $0x54] sm:$0xf]
        %v329 = vld [vmem:[%s235 + $0x58] sm:$0xf]
        %v330 = vld [vmem:[%s235 + $0x5c] sm:$0xf]
        %v331 = vld [vmem:[%s235 + $0x60] sm:$0xf]
        %v332 = vld [vmem:[%s235 + $0x64] sm:$0xf]
        %v333 = vld [vmem:[%s235 + $0x68] sm:$0xf]
        %v334 = vld [vmem:[%s235 + $0x6c] sm:$0xf]
        %v335 = vld [vmem:[%s235 + $0x70] sm:$0xf]
        %v336 = vld [vmem:[%s235 + $0x74] sm:$0xf]
        %v337 = vld [vmem:[%s235 + $0x78] sm:$0xf]
        %v338 = vld [vmem:[%s235 + $0x7c] sm:$0xf]
        %v339 = vunpack.c.l.bf16 %v307
        %v340 = vunpack.c.l.bf16 %v308
        %v341 = vunpack.c.l.bf16 %v309
        %v342 = vunpack.c.l.bf16 %v310
        %v343 = vunpack.c.l.bf16 %v311
        %v344 = vunpack.c.l.bf16 %v312
        %v345 = vunpack.c.l.bf16 %v313
        %v346 = vunpack.c.l.bf16 %v314
        %v347 = vunpack.c.l.bf16 %v315
        %v348 = vunpack.c.l.bf16 %v316
        %v349 = vunpack.c.l.bf16 %v317
        %v350 = vunpack.c.l.bf16 %v318
        %v351 = vunpack.c.l.bf16 %v319
        %v352 = vunpack.c.l.bf16 %v320
        %v353 = vunpack.c.l.bf16 %v321
        %v354 = vunpack.c.l.bf16 %v322
        %v355 = vunpack.c.l.bf16 %v323
        %v356 = vunpack.c.l.bf16 %v324
        %v357 = vunpack.c.l.bf16 %v325
        %v358 = vunpack.c.l.bf16 %v326
        %v359 = vunpack.c.l.bf16 %v327
        %v360 = vunpack.c.l.bf16 %v328
        %v361 = vunpack.c.l.bf16 %v329
        %v362 = vunpack.c.l.bf16 %v330
        %v363 = vunpack.c.l.bf16 %v331
        %v364 = vunpack.c.l.bf16 %v332
        %v365 = vunpack.c.l.bf16 %v333
        %v366 = vunpack.c.l.bf16 %v334
        %v367 = vunpack.c.l.bf16 %v335
        %v368 = vunpack.c.l.bf16 %v336
        %v369 = vunpack.c.l.bf16 %v337
        %v370 = vunpack.c.l.bf16 %v338
        %v371 = vmax.f32 %v339, 0.0
        %v372 = vmax.f32 %v340, 0.0
        %v373 = vmax.f32 %v341, 0.0
        %v374 = vmax.f32 %v342, 0.0
        %v375 = vmax.f32 %v343, 0.0
        %v376 = vmax.f32 %v344, 0.0
        %v377 = vmax.f32 %v345, 0.0
        %v378 = vmax.f32 %v346, 0.0
        %v379 = vmax.f32 %v347, 0.0
        %v380 = vmax.f32 %v348, 0.0
        %v381 = vmax.f32 %v349, 0.0
        %v382 = vmax.f32 %v350, 0.0
        %v383 = vmax.f32 %v351, 0.0
        %v384 = vmax.f32 %v352, 0.0
        %v385 = vmax.f32 %v353, 0.0
        %v386 = vmax.f32 %v354, 0.0
        %v387 = vmax.f32 %v355, 0.0
        %v388 = vmax.f32 %v356, 0.0
        %v389 = vmax.f32 %v357, 0.0
        %v390 = vmax.f32 %v358, 0.0
        %v391 = vmax.f32 %v359, 0.0
        %v392 = vmax.f32 %v360, 0.0
        %v393 = vmax.f32 %v361, 0.0
        %v394 = vmax.f32 %v362, 0.0
        %v395 = vmax.f32 %v363, 0.0
        %v396 = vmax.f32 %v364, 0.0
        %v397 = vmax.f32 %v365, 0.0
        %v398 = vmax.f32 %v366, 0.0
        %v399 = vmax.f32 %v367, 0.0
        %v400 = vmax.f32 %v368, 0.0
        %v401 = vmax.f32 %v369, 0.0
        %v402 = vmax.f32 %v370, 0.0
        %s403 = scalar_lea.vmem [#allocation2], 48
        %404 = vst.msk [vmem:[%s403 + $0x2] sm:$0xff] %vm245, %v371
        %405 = vst.msk [vmem:[%s403 + $0xa] sm:$0xff] %vm245, %v372
        %406 = vst.msk [vmem:[%s403 + $0x1a] sm:$0xff] %vm245, %v373
        %407 = vst.msk [vmem:[%s403 + $0x22] sm:$0xff] %vm245, %v374
        %408 = vst.msk [vmem:[%s403 + $0x32] sm:$0xff] %vm245, %v375
        %409 = vst.msk [vmem:[%s403 + $0x3a] sm:$0xff] %vm245, %v376
        %410 = vst.msk [vmem:[%s403 + $0x4a] sm:$0xff] %vm245, %v377
        %411 = vst.msk [vmem:[%s403 + $0x52] sm:$0xff] %vm245, %v378
        %412 = vst.msk [vmem:[%s403 + $0x62] sm:$0xff] %vm245, %v379
        %413 = vst.msk [vmem:[%s403 + $0x6a] sm:$0xff] %vm245, %v380
        %414 = vst.msk [vmem:[%s403 + $0x7a] sm:$0xff] %vm245, %v381
        %415 = vst.msk [vmem:[%s403 + $0x82] sm:$0xff] %vm245, %v382
        %416 = vst.msk [vmem:[%s403 + $0x92] sm:$0xff] %vm245, %v383
        %417 = vst.msk [vmem:[%s403 + $0x9a] sm:$0xff] %vm245, %v384
        %418 = vst.msk [vmem:[%s403 + $0xaa] sm:$0xff] %vm245, %v385
        %419 = vst.msk [vmem:[%s403 + $0xb2] sm:$0xff] %vm245, %v386
        %420 = vst.msk [vmem:[%s403 + $0xc2] sm:$0xff] %vm245, %v387
        %421 = vst.msk [vmem:[%s403 + $0xca] sm:$0xff] %vm245, %v388
        %422 = vst.msk [vmem:[%s403 + $0xda] sm:$0xff] %vm245, %v389
        %423 = vst.msk [vmem:[%s403 + $0xe2] sm:$0xff] %vm245, %v390
        %424 = vst.msk [vmem:[%s403 + $0xf2] sm:$0xff] %vm245, %v391
        %425 = vst.msk [vmem:[%s403 + $0xfa] sm:$0xff] %vm245, %v392
        %426 = vst.msk [vmem:[%s403 + $0x10a] sm:$0xff] %vm245, %v393
        %427 = vst.msk [vmem:[%s403 + $0x112] sm:$0xff] %vm245, %v394
        %428 = vst.msk [vmem:[%s403 + $0x122] sm:$0xff] %vm245, %v395
        %429 = vst.msk [vmem:[%s403 + $0x12a] sm:$0xff] %vm245, %v396
        %430 = vst.msk [vmem:[%s403 + $0x13a] sm:$0xff] %vm245, %v397
        %431 = vst.msk [vmem:[%s403 + $0x142] sm:$0xff] %vm245, %v398
        %432 = vst.msk [vmem:[%s403 + $0x152] sm:$0xff] %vm245, %v399
        %433 = vst.msk [vmem:[%s403 + $0x15a] sm:$0xff] %vm245, %v400
        %434 = vst.msk [vmem:[%s403 + $0x16a] sm:$0xff] %vm245, %v401
        %435 = vst.msk [vmem:[%s403 + $0x172] sm:$0xff] %vm245, %v402
        %v436 = vld [vmem:[#allocation2] sm:$0xff]
        %v437 = vld [vmem:[#allocation2 + $0x8] sm:$0xff]
        %v438 = vld [vmem:[#allocation2 + $0x10] sm:$0xf]
        %v439 = vld [vmem:[#allocation2 + $0x18] sm:$0xff]
        %v440 = vld [vmem:[#allocation2 + $0x20] sm:$0xff]
        %v441 = vld [vmem:[#allocation2 + $0x28] sm:$0xf]
        %v442 = vld [vmem:[#allocation2 + $0x30] sm:$0xff]
        %v443 = vld [vmem:[#allocation2 + $0x38] sm:$0xff]
        %v444 = vld [vmem:[#allocation2 + $0x40] sm:$0xf]
        %v445 = vld [vmem:[#allocation2 + $0x48] sm:$0xff]
        %v446 = vld [vmem:[#allocation2 + $0x50] sm:$0xff]
        %v447 = vld [vmem:[#allocation2 + $0x58] sm:$0xf]
        %v448 = vld [vmem:[#allocation2 + $0x60] sm:$0xff]
        %v449 = vld [vmem:[#allocation2 + $0x68] sm:$0xff]
        %v450 = vld [vmem:[#allocation2 + $0x70] sm:$0xf]
        %v451 = vld [vmem:[#allocation2 + $0x78] sm:$0xff]
        %v452 = vld [vmem:[#allocation2 + $0x80] sm:$0xff]
        %v453 = vld [vmem:[#allocation2 + $0x88] sm:$0xf]
        %v454 = vld [vmem:[#allocation2 + $0x90] sm:$0xff]
        %v455 = vld [vmem:[#allocation2 + $0x98] sm:$0xff]
        %v456 = vld [vmem:[#allocation2 + $0xa0] sm:$0xf]
        %v457 = vld [vmem:[#allocation2 + $0xa8] sm:$0xff]
        %v458 = vld [vmem:[#allocation2 + $0xb0] sm:$0xff]
        %v459 = vld [vmem:[#allocation2 + $0xb8] sm:$0xf]
        %v460 = vld [vmem:[#allocation2 + $0xc0] sm:$0xff]
        %v461 = vld [vmem:[#allocation2 + $0xc8] sm:$0xff]
        %v462 = vld [vmem:[#allocation2 + $0xd0] sm:$0xf]
        %v463 = vld [vmem:[#allocation2 + $0xd8] sm:$0xff]
        %v464 = vld [vmem:[#allocation2 + $0xe0] sm:$0xff]
        %v465 = vld [vmem:[#allocation2 + $0xe8] sm:$0xf]
        %v466 = vld [vmem:[#allocation2 + $0xf0] sm:$0xff]
        %v467 = vld [vmem:[#allocation2 + $0xf8] sm:$0xff]
        %v468 = vld [vmem:[#allocation2 + $0x100] sm:$0xf]
        %v469 = vld [vmem:[#allocation2 + $0x108] sm:$0xff]
        %v470 = vld [vmem:[#allocation2 + $0x110] sm:$0xff]
        %v471 = vld [vmem:[#allocation2 + $0x118] sm:$0xf]
        %v472 = vld [vmem:[#allocation2 + $0x120] sm:$0xff]
        %v473 = vld [vmem:[#allocation2 + $0x128] sm:$0xff]
        %v474 = vld [vmem:[#allocation2 + $0x130] sm:$0xf]
        %v475 = vld [vmem:[#allocation2 + $0x138] sm:$0xff]
        %v476 = vld [vmem:[#allocation2 + $0x140] sm:$0xff]
        %v477 = vld [vmem:[#allocation2 + $0x148] sm:$0xf]
        %v478 = vld [vmem:[#allocation2 + $0x150] sm:$0xff]
        %v479 = vld [vmem:[#allocation2 + $0x158] sm:$0xff]
        %v480 = vld [vmem:[#allocation2 + $0x160] sm:$0xf]
        %v481 = vld [vmem:[#allocation2 + $0x168] sm:$0xff]
        %v482 = vld [vmem:[#allocation2 + $0x170] sm:$0xff]
        %v483 = vld [vmem:[#allocation2 + $0x178] sm:$0xf]
        %v484 = vld [vmem:[#allocation2 + $0x180] sm:$0xff]
        %v485 = vld [vmem:[#allocation2 + $0x188] sm:$0xff]
        %v486 = vld [vmem:[#allocation2 + $0x190] sm:$0xf]
        %v487 = vld [vmem:[#allocation2 + $0x198] sm:$0xff]
        %v488 = vld [vmem:[#allocation2 + $0x1a0] sm:$0xff]
        %v489 = vld [vmem:[#allocation2 + $0x1a8] sm:$0xf]
        %v490 = vld [vmem:[#allocation2 + $0x1b0] sm:$0xff]
        %v491 = vld [vmem:[#allocation2 + $0x1b8] sm:$0xff]
        %v492 = vld [vmem:[#allocation2 + $0x1c0] sm:$0xf]
        %v493 = vld [vmem:[#allocation2 + $0x1c8] sm:$0xff]
        %v494 = vld [vmem:[#allocation2 + $0x1d0] sm:$0xff]
        %v495 = vld [vmem:[#allocation2 + $0x1d8] sm:$0xf]
        %v496 = vld [vmem:[%s1] sm:$0xff]
        %v497 = vld [vmem:[%s1 + $0x8] sm:$0x1]
        %v498 = vlaneseq
        %v499 = vshrl.u32 %v498, 7
        %v500 = vsub.s32 0, %v499
        %v501 = vrot.slane %v496, %v500
        %v502 = vmul.f32 %v436, %v501
        %v503 = vmul.f32 %v437, %v501
        %v504 = vmul.f32 %v439, %v501
        %v505 = vmul.f32 %v440, %v501
        %v506 = vmul.f32 %v442, %v501
        %v507 = vmul.f32 %v443, %v501
        %v508 = vmul.f32 %v445, %v501
        %v509 = vmul.f32 %v446, %v501
        %v510 = vmul.f32 %v448, %v501
        %v511 = vmul.f32 %v449, %v501
        %v512 = vmul.f32 %v451, %v501
        %v513 = vmul.f32 %v452, %v501
        %v514 = vmul.f32 %v454, %v501
        %v515 = vmul.f32 %v455, %v501
        %v516 = vmul.f32 %v457, %v501
        %v517 = vmul.f32 %v458, %v501
        %v518 = vmul.f32 %v460, %v501
        %v519 = vmul.f32 %v461, %v501
        %v520 = vmul.f32 %v463, %v501
        %v521 = vmul.f32 %v464, %v501
        %v522 = vmul.f32 %v466, %v501
        %v523 = vmul.f32 %v467, %v501
        %v524 = vmul.f32 %v469, %v501
        %v525 = vmul.f32 %v470, %v501
        %v526 = vmul.f32 %v472, %v501
        %v527 = vmul.f32 %v473, %v501
        %v528 = vmul.f32 %v475, %v501
        %v529 = vmul.f32 %v476, %v501
        %v530 = vmul.f32 %v478, %v501
        %v531 = vmul.f32 %v479, %v501
        %v532 = vmul.f32 %v481, %v501
        %v533 = vmul.f32 %v482, %v501
        %v534 = vadd.f32 %v502, 0.0
        %v535 = vadd.f32 %v503, 0.0
        %v536 = vadd.f32 %v504, 0.0
        %v537 = vadd.f32 %v505, 0.0
        %v538 = vadd.f32 %v506, 0.0
        %v539 = vadd.f32 %v507, 0.0
        %v540 = vadd.f32 %v508, 0.0
        %v541 = vadd.f32 %v509, 0.0
        %v542 = vadd.f32 %v510, 0.0
        %v543 = vadd.f32 %v511, 0.0
        %v544 = vadd.f32 %v512, 0.0
        %v545 = vadd.f32 %v513, 0.0
        %v546 = vadd.f32 %v514, 0.0
        %v547 = vadd.f32 %v515, 0.0
        %v548 = vadd.f32 %v516, 0.0
        %v549 = vadd.f32 %v517, 0.0
        %v550 = vadd.f32 %v518, 0.0
        %v551 = vadd.f32 %v519, 0.0
        %v552 = vadd.f32 %v520, 0.0
        %v553 = vadd.f32 %v521, 0.0
        %v554 = vadd.f32 %v522, 0.0
        %v555 = vadd.f32 %v523, 0.0
        %v556 = vadd.f32 %v524, 0.0
        %v557 = vadd.f32 %v525, 0.0
        %v558 = vadd.f32 %v526, 0.0
        %v559 = vadd.f32 %v527, 0.0
        %v560 = vadd.f32 %v528, 0.0
        %v561 = vadd.f32 %v529, 0.0
        %v562 = vadd.f32 %v530, 0.0
        %v563 = vadd.f32 %v531, 0.0
        %v564 = vadd.f32 %v532, 0.0
        %v565 = vadd.f32 %v533, 0.0
        %v566 = vlaneseq
        %v567 = vshrl.u32 %v566, 7
        %v568 = vsub.s32 1, %v567
        %v569 = vrot.slane %v496, %v568
        %v570 = vmul.f32 %v436, %v569
        %v571 = vmul.f32 %v437, %v569
        %v572 = vmul.f32 %v438, %v569
        %v573 = vmul.f32 %v439, %v569
        %v574 = vmul.f32 %v440, %v569
        %v575 = vmul.f32 %v441, %v569
        %v576 = vmul.f32 %v442, %v569
        %v577 = vmul.f32 %v443, %v569
        %v578 = vmul.f32 %v444, %v569
        %v579 = vmul.f32 %v445, %v569
        %v580 = vmul.f32 %v446, %v569
        %v581 = vmul.f32 %v447, %v569
        %v582 = vmul.f32 %v448, %v569
        %v583 = vmul.f32 %v449, %v569
        %v584 = vmul.f32 %v450, %v569
        %v585 = vmul.f32 %v451, %v569
        %v586 = vmul.f32 %v452, %v569
        %v587 = vmul.f32 %v453, %v569
        %v588 = vmul.f32 %v454, %v569
        %v589 = vmul.f32 %v455, %v569
        %v590 = vmul.f32 %v456, %v569
        %v591 = vmul.f32 %v457, %v569
        %v592 = vmul.f32 %v458, %v569
        %v593 = vmul.f32 %v459, %v569
        %v594 = vmul.f32 %v460, %v569
        %v595 = vmul.f32 %v461, %v569
        %v596 = vmul.f32 %v462, %v569
        %v597 = vmul.f32 %v463, %v569
        %v598 = vmul.f32 %v464, %v569
        %v599 = vmul.f32 %v465, %v569
        %v600 = vmul.f32 %v466, %v569
        %v601 = vmul.f32 %v467, %v569
        %v602 = vmul.f32 %v468, %v569
        %v603 = vmul.f32 %v469, %v569
        %v604 = vmul.f32 %v470, %v569
        %v605 = vmul.f32 %v471, %v569
        %v606 = vmul.f32 %v472, %v569
        %v607 = vmul.f32 %v473, %v569
        %v608 = vmul.f32 %v474, %v569
        %v609 = vmul.f32 %v475, %v569
        %v610 = vmul.f32 %v476, %v569
        %v611 = vmul.f32 %v477, %v569
        %v612 = vmul.f32 %v478, %v569
        %v613 = vmul.f32 %v479, %v569
        %v614 = vmul.f32 %v480, %v569
        %v615 = vmul.f32 %v481, %v569
        %v616 = vmul.f32 %v482, %v569
        %v617 = vmul.f32 %v483, %v569
        %vm666 = vcmask 1045504
        %v667 = vrot.slane %v570, 2
        %v668 = vrot.slane %v571, 2
        %v669 = vsel %vm666, %v667, %v668
        %v670 = vrot.slane %v572, 2
        %v671 = vsel %vm666, %v668, %v670
        %v672 = vrot.slane %v573, 2
        %v673 = vrot.slane %v574, 2
        %v674 = vsel %vm666, %v672, %v673
        %v675 = vrot.slane %v575, 2
        %v676 = vsel %vm666, %v673, %v675
        %v677 = vrot.slane %v576, 2
        %v678 = vrot.slane %v577, 2
        %v679 = vsel %vm666, %v677, %v678
        %v680 = vrot.slane %v578, 2
        %v681 = vsel %vm666, %v678, %v680
        %v682 = vrot.slane %v579, 2
        %v683 = vrot.slane %v580, 2
        %v684 = vsel %vm666, %v682, %v683
        %v685 = vrot.slane %v581, 2
        %v686 = vsel %vm666, %v683, %v685
        %v687 = vrot.slane %v582, 2
        %v688 = vrot.slane %v583, 2
        %v689 = vsel %vm666, %v687, %v688
        %v690 = vrot.slane %v584, 2
        %v691 = vsel %vm666, %v688, %v690
        %v692 = vrot.slane %v585, 2
        %v693 = vrot.slane %v586, 2
        %v694 = vsel %vm666, %v692, %v693
        %v695 = vrot.slane %v587, 2
        %v696 = vsel %vm666, %v693, %v695
        %v697 = vrot.slane %v588, 2
        %v698 = vrot.slane %v589, 2
        %v699 = vsel %vm666, %v697, %v698
        %v700 = vrot.slane %v590, 2
        %v701 = vsel %vm666, %v698, %v700
        %v702 = vrot.slane %v591, 2
        %v703 = vrot.slane %v592, 2
        %v704 = vsel %vm666, %v702, %v703
        %v705 = vrot.slane %v593, 2
        %v706 = vsel %vm666, %v703, %v705
        %v707 = vrot.slane %v594, 2
        %v708 = vrot.slane %v595, 2
        %v709 = vsel %vm666, %v707, %v708
        %v710 = vrot.slane %v596, 2
        %v711 = vsel %vm666, %v708, %v710
        %v712 = vrot.slane %v597, 2
        %v713 = vrot.slane %v598, 2
        %v714 = vsel %vm666, %v712, %v713
        %v715 = vrot.slane %v599, 2
        %v716 = vsel %vm666, %v713, %v715
        %v717 = vrot.slane %v600, 2
        %v718 = vrot.slane %v601, 2
        %v719 = vsel %vm666, %v717, %v718
        %v720 = vrot.slane %v602, 2
        %v721 = vsel %vm666, %v718, %v720
        %v722 = vrot.slane %v603, 2
        %v723 = vrot.slane %v604, 2
        %v724 = vsel %vm666, %v722, %v723
        %v725 = vrot.slane %v605, 2
        %v726 = vsel %vm666, %v723, %v725
        %v727 = vrot.slane %v606, 2
        %v728 = vrot.slane %v607, 2
        %v729 = vsel %vm666, %v727, %v728
        %v730 = vrot.slane %v608, 2
        %v731 = vsel %vm666, %v728, %v730
        %v732 = vrot.slane %v609, 2
        %v733 = vrot.slane %v610, 2
        %v734 = vsel %vm666, %v732, %v733
        %v735 = vrot.slane %v611, 2
        %v736 = vsel %vm666, %v733, %v735
        %v737 = vrot.slane %v612, 2
        %v738 = vrot.slane %v613, 2
        %v739 = vsel %vm666, %v737, %v738
        %v740 = vrot.slane %v614, 2
        %v741 = vsel %vm666, %v738, %v740
        %v742 = vrot.slane %v615, 2
        %v743 = vrot.slane %v616, 2
        %v744 = vsel %vm666, %v742, %v743
        %v745 = vrot.slane %v617, 2
        %v746 = vsel %vm666, %v743, %v745
        %v779 = vadd.f32 %v534, %v669
        %v780 = vadd.f32 %v535, %v671
        %v781 = vadd.f32 %v536, %v674
        %v782 = vadd.f32 %v537, %v676
        %v783 = vadd.f32 %v538, %v679
        %v784 = vadd.f32 %v539, %v681
        %v785 = vadd.f32 %v540, %v684
        %v786 = vadd.f32 %v541, %v686
        %v787 = vadd.f32 %v542, %v689
        %v788 = vadd.f32 %v543, %v691
        %v789 = vadd.f32 %v544, %v694
        %v790 = vadd.f32 %v545, %v696
        %v791 = vadd.f32 %v546, %v699
        %v792 = vadd.f32 %v547, %v701
        %v793 = vadd.f32 %v548, %v704
        %v794 = vadd.f32 %v549, %v706
        %v795 = vadd.f32 %v550, %v709
        %v796 = vadd.f32 %v551, %v711
        %v797 = vadd.f32 %v552, %v714
        %v798 = vadd.f32 %v553, %v716
        %v799 = vadd.f32 %v554, %v719
        %v800 = vadd.f32 %v555, %v721
        %v801 = vadd.f32 %v556, %v724
        %v802 = vadd.f32 %v557, %v726
        %v803 = vadd.f32 %v558, %v729
        %v804 = vadd.f32 %v559, %v731
        %v805 = vadd.f32 %v560, %v734
        %v806 = vadd.f32 %v561, %v736
        %v807 = vadd.f32 %v562, %v739
        %v808 = vadd.f32 %v563, %v741
        %v809 = vadd.f32 %v564, %v744
        %v810 = vadd.f32 %v565, %v746
        %v811 = vlaneseq
        %v812 = vshrl.u32 %v811, 7
        %v813 = vsub.s32 2, %v812
        %v814 = vrot.slane %v496, %v813
        %v815 = vmul.f32 %v436, %v814
        %v816 = vmul.f32 %v437, %v814
        %v817 = vmul.f32 %v438, %v814
        %v818 = vmul.f32 %v439, %v814
        %v819 = vmul.f32 %v440, %v814
        %v820 = vmul.f32 %v441, %v814
        %v821 = vmul.f32 %v442, %v814
        %v822 = vmul.f32 %v443, %v814
        %v823 = vmul.f32 %v444, %v814
        %v824 = vmul.f32 %v445, %v814
        %v825 = vmul.f32 %v446, %v814
        %v826 = vmul.f32 %v447, %v814
        %v827 = vmul.f32 %v448, %v814
        %v828 = vmul.f32 %v449, %v814
        %v829 = vmul.f32 %v450, %v814
        %v830 = vmul.f32 %v451, %v814
        %v831 = vmul.f32 %v452, %v814
        %v832 = vmul.f32 %v453, %v814
        %v833 = vmul.f32 %v454, %v814
        %v834 = vmul.f32 %v455, %v814
        %v835 = vmul.f32 %v456, %v814
        %v836 = vmul.f32 %v457, %v814
        %v837 = vmul.f32 %v458, %v814
        %v838 = vmul.f32 %v459, %v814
        %v839 = vmul.f32 %v460, %v814
        %v840 = vmul.f32 %v461, %v814
        %v841 = vmul.f32 %v462, %v814
        %v842 = vmul.f32 %v463, %v814
        %v843 = vmul.f32 %v464, %v814
        %v844 = vmul.f32 %v465, %v814
        %v845 = vmul.f32 %v466, %v814
        %v846 = vmul.f32 %v467, %v814
        %v847 = vmul.f32 %v468, %v814
        %v848 = vmul.f32 %v469, %v814
        %v849 = vmul.f32 %v470, %v814
        %v850 = vmul.f32 %v471, %v814
        %v851 = vmul.f32 %v472, %v814
        %v852 = vmul.f32 %v473, %v814
        %v853 = vmul.f32 %v474, %v814
        %v854 = vmul.f32 %v475, %v814
        %v855 = vmul.f32 %v476, %v814
        %v856 = vmul.f32 %v477, %v814
        %v857 = vmul.f32 %v478, %v814
        %v858 = vmul.f32 %v479, %v814
        %v859 = vmul.f32 %v480, %v814
        %v860 = vmul.f32 %v481, %v814
        %v861 = vmul.f32 %v482, %v814
        %v862 = vmul.f32 %v483, %v814
        %vm911 = vcmask 1043456
        %v912 = vrot.slane %v815, 4
        %v913 = vrot.slane %v816, 4
        %v914 = vsel %vm911, %v912, %v913
        %v915 = vrot.slane %v817, 4
        %v916 = vsel %vm911, %v913, %v915
        %v917 = vrot.slane %v818, 4
        %v918 = vrot.slane %v819, 4
        %v919 = vsel %vm911, %v917, %v918
        %v920 = vrot.slane %v820, 4
        %v921 = vsel %vm911, %v918, %v920
        %v922 = vrot.slane %v821, 4
        %v923 = vrot.slane %v822, 4
        %v924 = vsel %vm911, %v922, %v923
        %v925 = vrot.slane %v823, 4
        %v926 = vsel %vm911, %v923, %v925
        %v927 = vrot.slane %v824, 4
        %v928 = vrot.slane %v825, 4
        %v929 = vsel %vm911, %v927, %v928
        %v930 = vrot.slane %v826, 4
        %v931 = vsel %vm911, %v928, %v930
        %v932 = vrot.slane %v827, 4
        %v933 = vrot.slane %v828, 4
        %v934 = vsel %vm911, %v932, %v933
        %v935 = vrot.slane %v829, 4
        %v936 = vsel %vm911, %v933, %v935
        %v937 = vrot.slane %v830, 4
        %v938 = vrot.slane %v831, 4
        %v939 = vsel %vm911, %v937, %v938
        %v940 = vrot.slane %v832, 4
        %v941 = vsel %vm911, %v938, %v940
        %v942 = vrot.slane %v833, 4
        %v943 = vrot.slane %v834, 4
        %v944 = vsel %vm911, %v942, %v943
        %v945 = vrot.slane %v835, 4
        %v946 = vsel %vm911, %v943, %v945
        %v947 = vrot.slane %v836, 4
        %v948 = vrot.slane %v837, 4
        %v949 = vsel %vm911, %v947, %v948
        %v950 = vrot.slane %v838, 4
        %v951 = vsel %vm911, %v948, %v950
        %v952 = vrot.slane %v839, 4
        %v953 = vrot.slane %v840, 4
        %v954 = vsel %vm911, %v952, %v953
        %v955 = vrot.slane %v841, 4
        %v956 = vsel %vm911, %v953, %v955
        %v957 = vrot.slane %v842, 4
        %v958 = vrot.slane %v843, 4
        %v959 = vsel %vm911, %v957, %v958
        %v960 = vrot.slane %v844, 4
        %v961 = vsel %vm911, %v958, %v960
        %v962 = vrot.slane %v845, 4
        %v963 = vrot.slane %v846, 4
        %v964 = vsel %vm911, %v962, %v963
        %v965 = vrot.slane %v847, 4
        %v966 = vsel %vm911, %v963, %v965
        %v967 = vrot.slane %v848, 4
        %v968 = vrot.slane %v849, 4
        %v969 = vsel %vm911, %v967, %v968
        %v970 = vrot.slane %v850, 4
        %v971 = vsel %vm911, %v968, %v970
        %v972 = vrot.slane %v851, 4
        %v973 = vrot.slane %v852, 4
        %v974 = vsel %vm911, %v972, %v973
        %v975 = vrot.slane %v853, 4
        %v976 = vsel %vm911, %v973, %v975
        %v977 = vrot.slane %v854, 4
        %v978 = vrot.slane %v855, 4
        %v979 = vsel %vm911, %v977, %v978
        %v980 = vrot.slane %v856, 4
        %v981 = vsel %vm911, %v978, %v980
        %v982 = vrot.slane %v857, 4
        %v983 = vrot.slane %v858, 4
        %v984 = vsel %vm911, %v982, %v983
        %v985 = vrot.slane %v859, 4
        %v986 = vsel %vm911, %v983, %v985
        %v987 = vrot.slane %v860, 4
        %v988 = vrot.slane %v861, 4
        %v989 = vsel %vm911, %v987, %v988
        %v990 = vrot.slane %v862, 4
        %v991 = vsel %vm911, %v988, %v990
        %v1024 = vadd.f32 %v779, %v914
        %v1025 = vadd.f32 %v780, %v916
        %v1026 = vadd.f32 %v781, %v919
        %v1027 = vadd.f32 %v782, %v921
        %v1028 = vadd.f32 %v783, %v924
        %v1029 = vadd.f32 %v784, %v926
        %v1030 = vadd.f32 %v785, %v929
        %v1031 = vadd.f32 %v786, %v931
        %v1032 = vadd.f32 %v787, %v934
        %v1033 = vadd.f32 %v788, %v936
        %v1034 = vadd.f32 %v789, %v939
        %v1035 = vadd.f32 %v790, %v941
        %v1036 = vadd.f32 %v791, %v944
        %v1037 = vadd.f32 %v792, %v946
        %v1038 = vadd.f32 %v793, %v949
        %v1039 = vadd.f32 %v794, %v951
        %v1040 = vadd.f32 %v795, %v954
        %v1041 = vadd.f32 %v796, %v956
        %v1042 = vadd.f32 %v797, %v959
        %v1043 = vadd.f32 %v798, %v961
        %v1044 = vadd.f32 %v799, %v964
        %v1045 = vadd.f32 %v800, %v966
        %v1046 = vadd.f32 %v801, %v969
        %v1047 = vadd.f32 %v802, %v971
        %v1048 = vadd.f32 %v803, %v974
        %v1049 = vadd.f32 %v804, %v976
        %v1050 = vadd.f32 %v805, %v979
        %v1051 = vadd.f32 %v806, %v981
        %v1052 = vadd.f32 %v807, %v984
        %v1053 = vadd.f32 %v808, %v986
        %v1054 = vadd.f32 %v809, %v989
        %v1055 = vadd.f32 %v810, %v991
        %v1056 = vlaneseq
        %v1057 = vshrl.u32 %v1056, 7
        %v1058 = vsub.s32 3, %v1057
        %v1059 = vrot.slane %v496, %v1058
        %v1060 = vmul.f32 %v442, %v1059
        %v1061 = vmul.f32 %v443, %v1059
        %v1062 = vmul.f32 %v445, %v1059
        %v1063 = vmul.f32 %v446, %v1059
        %v1064 = vmul.f32 %v448, %v1059
        %v1065 = vmul.f32 %v449, %v1059
        %v1066 = vmul.f32 %v451, %v1059
        %v1067 = vmul.f32 %v452, %v1059
        %v1068 = vmul.f32 %v454, %v1059
        %v1069 = vmul.f32 %v455, %v1059
        %v1070 = vmul.f32 %v457, %v1059
        %v1071 = vmul.f32 %v458, %v1059
        %v1072 = vmul.f32 %v460, %v1059
        %v1073 = vmul.f32 %v461, %v1059
        %v1074 = vmul.f32 %v463, %v1059
        %v1075 = vmul.f32 %v464, %v1059
        %v1076 = vmul.f32 %v466, %v1059
        %v1077 = vmul.f32 %v467, %v1059
        %v1078 = vmul.f32 %v469, %v1059
        %v1079 = vmul.f32 %v470, %v1059
        %v1080 = vmul.f32 %v472, %v1059
        %v1081 = vmul.f32 %v473, %v1059
        %v1082 = vmul.f32 %v475, %v1059
        %v1083 = vmul.f32 %v476, %v1059
        %v1084 = vmul.f32 %v478, %v1059
        %v1085 = vmul.f32 %v479, %v1059
        %v1086 = vmul.f32 %v481, %v1059
        %v1087 = vmul.f32 %v482, %v1059
        %v1088 = vmul.f32 %v484, %v1059
        %v1089 = vmul.f32 %v485, %v1059
        %v1090 = vmul.f32 %v487, %v1059
        %v1091 = vmul.f32 %v488, %v1059
        %v1092 = vadd.f32 %v1024, %v1060
        %v1093 = vadd.f32 %v1025, %v1061
        %v1094 = vadd.f32 %v1026, %v1062
        %v1095 = vadd.f32 %v1027, %v1063
        %v1096 = vadd.f32 %v1028, %v1064
        %v1097 = vadd.f32 %v1029, %v1065
        %v1098 = vadd.f32 %v1030, %v1066
        %v1099 = vadd.f32 %v1031, %v1067
        %v1100 = vadd.f32 %v1032, %v1068
        %v1101 = vadd.f32 %v1033, %v1069
        %v1102 = vadd.f32 %v1034, %v1070
        %v1103 = vadd.f32 %v1035, %v1071
        %v1104 = vadd.f32 %v1036, %v1072
        %v1105 = vadd.f32 %v1037, %v1073
        %v1106 = vadd.f32 %v1038, %v1074
        %v1107 = vadd.f32 %v1039, %v1075
        %v1108 = vadd.f32 %v1040, %v1076
        %v1109 = vadd.f32 %v1041, %v1077
        %v1110 = vadd.f32 %v1042, %v1078
        %v1111 = vadd.f32 %v1043, %v1079
        %v1112 = vadd.f32 %v1044, %v1080
        %v1113 = vadd.f32 %v1045, %v1081
        %v1114 = vadd.f32 %v1046, %v1082
        %v1115 = vadd.f32 %v1047, %v1083
        %v1116 = vadd.f32 %v1048, %v1084
        %v1117 = vadd.f32 %v1049, %v1085
        %v1118 = vadd.f32 %v1050, %v1086
        %v1119 = vadd.f32 %v1051, %v1087
        %v1120 = vadd.f32 %v1052, %v1088
        %v1121 = vadd.f32 %v1053, %v1089
        %v1122 = vadd.f32 %v1054, %v1090
        %v1123 = vadd.f32 %v1055, %v1091
        %v1124 = vlaneseq
        %v1125 = vshrl.u32 %v1124, 7
        %v1126 = vsub.s32 4, %v1125
        %v1127 = vrot.slane %v496, %v1126
        %v1128 = vmul.f32 %v442, %v1127
        %v1129 = vmul.f32 %v443, %v1127
        %v1130 = vmul.f32 %v444, %v1127
        %v1131 = vmul.f32 %v445, %v1127
        %v1132 = vmul.f32 %v446, %v1127
        %v1133 = vmul.f32 %v447, %v1127
        %v1134 = vmul.f32 %v448, %v1127
        %v1135 = vmul.f32 %v449, %v1127
        %v1136 = vmul.f32 %v450, %v1127
        %v1137 = vmul.f32 %v451, %v1127
        %v1138 = vmul.f32 %v452, %v1127
        %v1139 = vmul.f32 %v453, %v1127
        %v1140 = vmul.f32 %v454, %v1127
        %v1141 = vmul.f32 %v455, %v1127
        %v1142 = vmul.f32 %v456, %v1127
        %v1143 = vmul.f32 %v457, %v1127
        %v1144 = vmul.f32 %v458, %v1127
        %v1145 = vmul.f32 %v459, %v1127
        %v1146 = vmul.f32 %v460, %v1127
        %v1147 = vmul.f32 %v461, %v1127
        %v1148 = vmul.f32 %v462, %v1127
        %v1149 = vmul.f32 %v463, %v1127
        %v1150 = vmul.f32 %v464, %v1127
        %v1151 = vmul.f32 %v465, %v1127
        %v1152 = vmul.f32 %v466, %v1127
        %v1153 = vmul.f32 %v467, %v1127
        %v1154 = vmul.f32 %v468, %v1127
        %v1155 = vmul.f32 %v469, %v1127
        %v1156 = vmul.f32 %v470, %v1127
        %v1157 = vmul.f32 %v471, %v1127
        %v1158 = vmul.f32 %v472, %v1127
        %v1159 = vmul.f32 %v473, %v1127
        %v1160 = vmul.f32 %v474, %v1127
        %v1161 = vmul.f32 %v475, %v1127
        %v1162 = vmul.f32 %v476, %v1127
        %v1163 = vmul.f32 %v477, %v1127
        %v1164 = vmul.f32 %v478, %v1127
        %v1165 = vmul.f32 %v479, %v1127
        %v1166 = vmul.f32 %v480, %v1127
        %v1167 = vmul.f32 %v481, %v1127
        %v1168 = vmul.f32 %v482, %v1127
        %v1169 = vmul.f32 %v483, %v1127
        %v1170 = vmul.f32 %v484, %v1127
        %v1171 = vmul.f32 %v485, %v1127
        %v1172 = vmul.f32 %v486, %v1127
        %v1173 = vmul.f32 %v487, %v1127
        %v1174 = vmul.f32 %v488, %v1127
        %v1175 = vmul.f32 %v489, %v1127
        %v1224 = vrot.slane %v1128, 2
        %v1225 = vrot.slane %v1129, 2
        %v1226 = vsel %vm666, %v1224, %v1225
        %v1227 = vrot.slane %v1130, 2
        %v1228 = vsel %vm666, %v1225, %v1227
        %v1229 = vrot.slane %v1131, 2
        %v1230 = vrot.slane %v1132, 2
        %v1231 = vsel %vm666, %v1229, %v1230
        %v1232 = vrot.slane %v1133, 2
        %v1233 = vsel %vm666, %v1230, %v1232
        %v1234 = vrot.slane %v1134, 2
        %v1235 = vrot.slane %v1135, 2
        %v1236 = vsel %vm666, %v1234, %v1235
        %v1237 = vrot.slane %v1136, 2
        %v1238 = vsel %vm666, %v1235, %v1237
        %v1239 = vrot.slane %v1137, 2
        %v1240 = vrot.slane %v1138, 2
        %v1241 = vsel %vm666, %v1239, %v1240
        %v1242 = vrot.slane %v1139, 2
        %v1243 = vsel %vm666, %v1240, %v1242
        %v1244 = vrot.slane %v1140, 2
        %v1245 = vrot.slane %v1141, 2
        %v1246 = vsel %vm666, %v1244, %v1245
        %v1247 = vrot.slane %v1142, 2
        %v1248 = vsel %vm666, %v1245, %v1247
        %v1249 = vrot.slane %v1143, 2
        %v1250 = vrot.slane %v1144, 2
        %v1251 = vsel %vm666, %v1249, %v1250
        %v1252 = vrot.slane %v1145, 2
        %v1253 = vsel %vm666, %v1250, %v1252
        %v1254 = vrot.slane %v1146, 2
        %v1255 = vrot.slane %v1147, 2
        %v1256 = vsel %vm666, %v1254, %v1255
        %v1257 = vrot.slane %v1148, 2
        %v1258 = vsel %vm666, %v1255, %v1257
        %v1259 = vrot.slane %v1149, 2
        %v1260 = vrot.slane %v1150, 2
        %v1261 = vsel %vm666, %v1259, %v1260
        %v1262 = vrot.slane %v1151, 2
        %v1263 = vsel %vm666, %v1260, %v1262
        %v1264 = vrot.slane %v1152, 2
        %v1265 = vrot.slane %v1153, 2
        %v1266 = vsel %vm666, %v1264, %v1265
        %v1267 = vrot.slane %v1154, 2
        %v1268 = vsel %vm666, %v1265, %v1267
        %v1269 = vrot.slane %v1155, 2
        %v1270 = vrot.slane %v1156, 2
        %v1271 = vsel %vm666, %v1269, %v1270
        %v1272 = vrot.slane %v1157, 2
        %v1273 = vsel %vm666, %v1270, %v1272
        %v1274 = vrot.slane %v1158, 2
        %v1275 = vrot.slane %v1159, 2
        %v1276 = vsel %vm666, %v1274, %v1275
        %v1277 = vrot.slane %v1160, 2
        %v1278 = vsel %vm666, %v1275, %v1277
        %v1279 = vrot.slane %v1161, 2
        %v1280 = vrot.slane %v1162, 2
        %v1281 = vsel %vm666, %v1279, %v1280
        %v1282 = vrot.slane %v1163, 2
        %v1283 = vsel %vm666, %v1280, %v1282
        %v1284 = vrot.slane %v1164, 2
        %v1285 = vrot.slane %v1165, 2
        %v1286 = vsel %vm666, %v1284, %v1285
        %v1287 = vrot.slane %v1166, 2
        %v1288 = vsel %vm666, %v1285, %v1287
        %v1289 = vrot.slane %v1167, 2
        %v1290 = vrot.slane %v1168, 2
        %v1291 = vsel %vm666, %v1289, %v1290
        %v1292 = vrot.slane %v1169, 2
        %v1293 = vsel %vm666, %v1290, %v1292
        %v1294 = vrot.slane %v1170, 2
        %v1295 = vrot.slane %v1171, 2
        %v1296 = vsel %vm666, %v1294, %v1295
        %v1297 = vrot.slane %v1172, 2
        %v1298 = vsel %vm666, %v1295, %v1297
        %v1299 = vrot.slane %v1173, 2
        %v1300 = vrot.slane %v1174, 2
        %v1301 = vsel %vm666, %v1299, %v1300
        %v1302 = vrot.slane %v1175, 2
        %v1303 = vsel %vm666, %v1300, %v1302
        %v1336 = vadd.f32 %v1092, %v1226
        %v1337 = vadd.f32 %v1093, %v1228
        %v1338 = vadd.f32 %v1094, %v1231
        %v1339 = vadd.f32 %v1095, %v1233
        %v1340 = vadd.f32 %v1096, %v1236
        %v1341 = vadd.f32 %v1097, %v1238
        %v1342 = vadd.f32 %v1098, %v1241
        %v1343 = vadd.f32 %v1099, %v1243
        %v1344 = vadd.f32 %v1100, %v1246
        %v1345 = vadd.f32 %v1101, %v1248
        %v1346 = vadd.f32 %v1102, %v1251
        %v1347 = vadd.f32 %v1103, %v1253
        %v1348 = vadd.f32 %v1104, %v1256
        %v1349 = vadd.f32 %v1105, %v1258
        %v1350 = vadd.f32 %v1106, %v1261
        %v1351 = vadd.f32 %v1107, %v1263
        %v1352 = vadd.f32 %v1108, %v1266
        %v1353 = vadd.f32 %v1109, %v1268
        %v1354 = vadd.f32 %v1110, %v1271
        %v1355 = vadd.f32 %v1111, %v1273
        %v1356 = vadd.f32 %v1112, %v1276
        %v1357 = vadd.f32 %v1113, %v1278
        %v1358 = vadd.f32 %v1114, %v1281
        %v1359 = vadd.f32 %v1115, %v1283
        %v1360 = vadd.f32 %v1116, %v1286
        %v1361 = vadd.f32 %v1117, %v1288
        %v1362 = vadd.f32 %v1118, %v1291
        %v1363 = vadd.f32 %v1119, %v1293
        %v1364 = vadd.f32 %v1120, %v1296
        %v1365 = vadd.f32 %v1121, %v1298
        %v1366 = vadd.f32 %v1122, %v1301
        %v1367 = vadd.f32 %v1123, %v1303
        %v1368 = vlaneseq
        %v1369 = vshrl.u32 %v1368, 7
        %v1370 = vsub.s32 5, %v1369
        %v1371 = vrot.slane %v496, %v1370
        %v1372 = vmul.f32 %v442, %v1371
        %v1373 = vmul.f32 %v443, %v1371
        %v1374 = vmul.f32 %v444, %v1371
        %v1375 = vmul.f32 %v445, %v1371
        %v1376 = vmul.f32 %v446, %v1371
        %v1377 = vmul.f32 %v447, %v1371
        %v1378 = vmul.f32 %v448, %v1371
        %v1379 = vmul.f32 %v449, %v1371
        %v1380 = vmul.f32 %v450, %v1371
        %v1381 = vmul.f32 %v451, %v1371
        %v1382 = vmul.f32 %v452, %v1371
        %v1383 = vmul.f32 %v453, %v1371
        %v1384 = vmul.f32 %v454, %v1371
        %v1385 = vmul.f32 %v455, %v1371
        %v1386 = vmul.f32 %v456, %v1371
        %v1387 = vmul.f32 %v457, %v1371
        %v1388 = vmul.f32 %v458, %v1371
        %v1389 = vmul.f32 %v459, %v1371
        %v1390 = vmul.f32 %v460, %v1371
        %v1391 = vmul.f32 %v461, %v1371
        %v1392 = vmul.f32 %v462, %v1371
        %v1393 = vmul.f32 %v463, %v1371
        %v1394 = vmul.f32 %v464, %v1371
        %v1395 = vmul.f32 %v465, %v1371
        %v1396 = vmul.f32 %v466, %v1371
        %v1397 = vmul.f32 %v467, %v1371
        %v1398 = vmul.f32 %v468, %v1371
        %v1399 = vmul.f32 %v469, %v1371
        %v1400 = vmul.f32 %v470, %v1371
        %v1401 = vmul.f32 %v471, %v1371
        %v1402 = vmul.f32 %v472, %v1371
        %v1403 = vmul.f32 %v473, %v1371
        %v1404 = vmul.f32 %v474, %v1371
        %v1405 = vmul.f32 %v475, %v1371
        %v1406 = vmul.f32 %v476, %v1371
        %v1407 = vmul.f32 %v477, %v1371
        %v1408 = vmul.f32 %v478, %v1371
        %v1409 = vmul.f32 %v479, %v1371
        %v1410 = vmul.f32 %v480, %v1371
        %v1411 = vmul.f32 %v481, %v1371
        %v1412 = vmul.f32 %v482, %v1371
        %v1413 = vmul.f32 %v483, %v1371
        %v1414 = vmul.f32 %v484, %v1371
        %v1415 = vmul.f32 %v485, %v1371
        %v1416 = vmul.f32 %v486, %v1371
        %v1417 = vmul.f32 %v487, %v1371
        %v1418 = vmul.f32 %v488, %v1371
        %v1419 = vmul.f32 %v489, %v1371
        %v1468 = vrot.slane %v1372, 4
        %v1469 = vrot.slane %v1373, 4
        %v1470 = vsel %vm911, %v1468, %v1469
        %v1471 = vrot.slane %v1374, 4
        %v1472 = vsel %vm911, %v1469, %v1471
        %v1473 = vrot.slane %v1375, 4
        %v1474 = vrot.slane %v1376, 4
        %v1475 = vsel %vm911, %v1473, %v1474
        %v1476 = vrot.slane %v1377, 4
        %v1477 = vsel %vm911, %v1474, %v1476
        %v1478 = vrot.slane %v1378, 4
        %v1479 = vrot.slane %v1379, 4
        %v1480 = vsel %vm911, %v1478, %v1479
        %v1481 = vrot.slane %v1380, 4
        %v1482 = vsel %vm911, %v1479, %v1481
        %v1483 = vrot.slane %v1381, 4
        %v1484 = vrot.slane %v1382, 4
        %v1485 = vsel %vm911, %v1483, %v1484
        %v1486 = vrot.slane %v1383, 4
        %v1487 = vsel %vm911, %v1484, %v1486
        %v1488 = vrot.slane %v1384, 4
        %v1489 = vrot.slane %v1385, 4
        %v1490 = vsel %vm911, %v1488, %v1489
        %v1491 = vrot.slane %v1386, 4
        %v1492 = vsel %vm911, %v1489, %v1491
        %v1493 = vrot.slane %v1387, 4
        %v1494 = vrot.slane %v1388, 4
        %v1495 = vsel %vm911, %v1493, %v1494
        %v1496 = vrot.slane %v1389, 4
        %v1497 = vsel %vm911, %v1494, %v1496
        %v1498 = vrot.slane %v1390, 4
        %v1499 = vrot.slane %v1391, 4
        %v1500 = vsel %vm911, %v1498, %v1499
        %v1501 = vrot.slane %v1392, 4
        %v1502 = vsel %vm911, %v1499, %v1501
        %v1503 = vrot.slane %v1393, 4
        %v1504 = vrot.slane %v1394, 4
        %v1505 = vsel %vm911, %v1503, %v1504
        %v1506 = vrot.slane %v1395, 4
        %v1507 = vsel %vm911, %v1504, %v1506
        %v1508 = vrot.slane %v1396, 4
        %v1509 = vrot.slane %v1397, 4
        %v1510 = vsel %vm911, %v1508, %v1509
        %v1511 = vrot.slane %v1398, 4
        %v1512 = vsel %vm911, %v1509, %v1511
        %v1513 = vrot.slane %v1399, 4
        %v1514 = vrot.slane %v1400, 4
        %v1515 = vsel %vm911, %v1513, %v1514
        %v1516 = vrot.slane %v1401, 4
        %v1517 = vsel %vm911, %v1514, %v1516
        %v1518 = vrot.slane %v1402, 4
        %v1519 = vrot.slane %v1403, 4
        %v1520 = vsel %vm911, %v1518, %v1519
        %v1521 = vrot.slane %v1404, 4
        %v1522 = vsel %vm911, %v1519, %v1521
        %v1523 = vrot.slane %v1405, 4
        %v1524 = vrot.slane %v1406, 4
        %v1525 = vsel %vm911, %v1523, %v1524
        %v1526 = vrot.slane %v1407, 4
        %v1527 = vsel %vm911, %v1524, %v1526
        %v1528 = vrot.slane %v1408, 4
        %v1529 = vrot.slane %v1409, 4
        %v1530 = vsel %vm911, %v1528, %v1529
        %v1531 = vrot.slane %v1410, 4
        %v1532 = vsel %vm911, %v1529, %v1531
        %v1533 = vrot.slane %v1411, 4
        %v1534 = vrot.slane %v1412, 4
        %v1535 = vsel %vm911, %v1533, %v1534
        %v1536 = vrot.slane %v1413, 4
        %v1537 = vsel %vm911, %v1534, %v1536
        %v1538 = vrot.slane %v1414, 4
        %v1539 = vrot.slane %v1415, 4
        %v1540 = vsel %vm911, %v1538, %v1539
        %v1541 = vrot.slane %v1416, 4
        %v1542 = vsel %vm911, %v1539, %v1541
        %v1543 = vrot.slane %v1417, 4
        %v1544 = vrot.slane %v1418, 4
        %v1545 = vsel %vm911, %v1543, %v1544
        %v1546 = vrot.slane %v1419, 4
        %v1547 = vsel %vm911, %v1544, %v1546
        %v1580 = vadd.f32 %v1336, %v1470
        %v1581 = vadd.f32 %v1337, %v1472
        %v1582 = vadd.f32 %v1338, %v1475
        %v1583 = vadd.f32 %v1339, %v1477
        %v1584 = vadd.f32 %v1340, %v1480
        %v1585 = vadd.f32 %v1341, %v1482
        %v1586 = vadd.f32 %v1342, %v1485
        %v1587 = vadd.f32 %v1343, %v1487
        %v1588 = vadd.f32 %v1344, %v1490
        %v1589 = vadd.f32 %v1345, %v1492
        %v1590 = vadd.f32 %v1346, %v1495
        %v1591 = vadd.f32 %v1347, %v1497
        %v1592 = vadd.f32 %v1348, %v1500
        %v1593 = vadd.f32 %v1349, %v1502
        %v1594 = vadd.f32 %v1350, %v1505
        %v1595 = vadd.f32 %v1351, %v1507
        %v1596 = vadd.f32 %v1352, %v1510
        %v1597 = vadd.f32 %v1353, %v1512
        %v1598 = vadd.f32 %v1354, %v1515
        %v1599 = vadd.f32 %v1355, %v1517
        %v1600 = vadd.f32 %v1356, %v1520
        %v1601 = vadd.f32 %v1357, %v1522
        %v1602 = vadd.f32 %v1358, %v1525
        %v1603 = vadd.f32 %v1359, %v1527
        %v1604 = vadd.f32 %v1360, %v1530
        %v1605 = vadd.f32 %v1361, %v1532
        %v1606 = vadd.f32 %v1362, %v1535
        %v1607 = vadd.f32 %v1363, %v1537
        %v1608 = vadd.f32 %v1364, %v1540
        %v1609 = vadd.f32 %v1365, %v1542
        %v1610 = vadd.f32 %v1366, %v1545
        %v1611 = vadd.f32 %v1367, %v1547
        %v1612 = vlaneseq
        %v1613 = vshrl.u32 %v1612, 7
        %v1614 = vsub.s32 6, %v1613
        %v1615 = vrot.slane %v496, %v1614
        %v1616 = vmul.f32 %v448, %v1615
        %v1617 = vmul.f32 %v449, %v1615
        %v1618 = vmul.f32 %v451, %v1615
        %v1619 = vmul.f32 %v452, %v1615
        %v1620 = vmul.f32 %v454, %v1615
        %v1621 = vmul.f32 %v455, %v1615
        %v1622 = vmul.f32 %v457, %v1615
        %v1623 = vmul.f32 %v458, %v1615
        %v1624 = vmul.f32 %v460, %v1615
        %v1625 = vmul.f32 %v461, %v1615
        %v1626 = vmul.f32 %v463, %v1615
        %v1627 = vmul.f32 %v464, %v1615
        %v1628 = vmul.f32 %v466, %v1615
        %v1629 = vmul.f32 %v467, %v1615
        %v1630 = vmul.f32 %v469, %v1615
        %v1631 = vmul.f32 %v470, %v1615
        %v1632 = vmul.f32 %v472, %v1615
        %v1633 = vmul.f32 %v473, %v1615
        %v1634 = vmul.f32 %v475, %v1615
        %v1635 = vmul.f32 %v476, %v1615
        %v1636 = vmul.f32 %v478, %v1615
        %v1637 = vmul.f32 %v479, %v1615
        %v1638 = vmul.f32 %v481, %v1615
        %v1639 = vmul.f32 %v482, %v1615
        %v1640 = vmul.f32 %v484, %v1615
        %v1641 = vmul.f32 %v485, %v1615
        %v1642 = vmul.f32 %v487, %v1615
        %v1643 = vmul.f32 %v488, %v1615
        %v1644 = vmul.f32 %v490, %v1615
        %v1645 = vmul.f32 %v491, %v1615
        %v1646 = vmul.f32 %v493, %v1615
        %v1647 = vmul.f32 %v494, %v1615
        %v1648 = vadd.f32 %v1580, %v1616
        %v1649 = vadd.f32 %v1581, %v1617
        %v1650 = vadd.f32 %v1582, %v1618
        %v1651 = vadd.f32 %v1583, %v1619
        %v1652 = vadd.f32 %v1584, %v1620
        %v1653 = vadd.f32 %v1585, %v1621
        %v1654 = vadd.f32 %v1586, %v1622
        %v1655 = vadd.f32 %v1587, %v1623
        %v1656 = vadd.f32 %v1588, %v1624
        %v1657 = vadd.f32 %v1589, %v1625
        %v1658 = vadd.f32 %v1590, %v1626
        %v1659 = vadd.f32 %v1591, %v1627
        %v1660 = vadd.f32 %v1592, %v1628
        %v1661 = vadd.f32 %v1593, %v1629
        %v1662 = vadd.f32 %v1594, %v1630
        %v1663 = vadd.f32 %v1595, %v1631
        %v1664 = vadd.f32 %v1596, %v1632
        %v1665 = vadd.f32 %v1597, %v1633
        %v1666 = vadd.f32 %v1598, %v1634
        %v1667 = vadd.f32 %v1599, %v1635
        %v1668 = vadd.f32 %v1600, %v1636
        %v1669 = vadd.f32 %v1601, %v1637
        %v1670 = vadd.f32 %v1602, %v1638
        %v1671 = vadd.f32 %v1603, %v1639
        %v1672 = vadd.f32 %v1604, %v1640
        %v1673 = vadd.f32 %v1605, %v1641
        %v1674 = vadd.f32 %v1606, %v1642
        %v1675 = vadd.f32 %v1607, %v1643
        %v1676 = vadd.f32 %v1608, %v1644
        %v1677 = vadd.f32 %v1609, %v1645
        %v1678 = vadd.f32 %v1610, %v1646
        %v1679 = vadd.f32 %v1611, %v1647
        %v1680 = vlaneseq
        %v1681 = vshrl.u32 %v1680, 7
        %v1682 = vsub.s32 7, %v1681
        %v1683 = vrot.slane %v496, %v1682
        %v1684 = vmul.f32 %v448, %v1683
        %v1685 = vmul.f32 %v449, %v1683
        %v1686 = vmul.f32 %v450, %v1683
        %v1687 = vmul.f32 %v451, %v1683
        %v1688 = vmul.f32 %v452, %v1683
        %v1689 = vmul.f32 %v453, %v1683
        %v1690 = vmul.f32 %v454, %v1683
        %v1691 = vmul.f32 %v455, %v1683
        %v1692 = vmul.f32 %v456, %v1683
        %v1693 = vmul.f32 %v457, %v1683
        %v1694 = vmul.f32 %v458, %v1683
        %v1695 = vmul.f32 %v459, %v1683
        %v1696 = vmul.f32 %v460, %v1683
        %v1697 = vmul.f32 %v461, %v1683
        %v1698 = vmul.f32 %v462, %v1683
        %v1699 = vmul.f32 %v463, %v1683
        %v1700 = vmul.f32 %v464, %v1683
        %v1701 = vmul.f32 %v465, %v1683
        %v1702 = vmul.f32 %v466, %v1683
        %v1703 = vmul.f32 %v467, %v1683
        %v1704 = vmul.f32 %v468, %v1683
        %v1705 = vmul.f32 %v469, %v1683
        %v1706 = vmul.f32 %v470, %v1683
        %v1707 = vmul.f32 %v471, %v1683
        %v1708 = vmul.f32 %v472, %v1683
        %v1709 = vmul.f32 %v473, %v1683
        %v1710 = vmul.f32 %v474, %v1683
        %v1711 = vmul.f32 %v475, %v1683
        %v1712 = vmul.f32 %v476, %v1683
        %v1713 = vmul.f32 %v477, %v1683
        %v1714 = vmul.f32 %v478, %v1683
        %v1715 = vmul.f32 %v479, %v1683
        %v1716 = vmul.f32 %v480, %v1683
        %v1717 = vmul.f32 %v481, %v1683
        %v1718 = vmul.f32 %v482, %v1683
        %v1719 = vmul.f32 %v483, %v1683
        %v1720 = vmul.f32 %v484, %v1683
        %v1721 = vmul.f32 %v485, %v1683
        %v1722 = vmul.f32 %v486, %v1683
        %v1723 = vmul.f32 %v487, %v1683
        %v1724 = vmul.f32 %v488, %v1683
        %v1725 = vmul.f32 %v489, %v1683
        %v1726 = vmul.f32 %v490, %v1683
        %v1727 = vmul.f32 %v491, %v1683
        %v1728 = vmul.f32 %v492, %v1683
        %v1729 = vmul.f32 %v493, %v1683
        %v1730 = vmul.f32 %v494, %v1683
        %v1731 = vmul.f32 %v495, %v1683
        %v1780 = vrot.slane %v1684, 2
        %v1781 = vrot.slane %v1685, 2
        %v1782 = vsel %vm666, %v1780, %v1781
        %v1783 = vrot.slane %v1686, 2
        %v1784 = vsel %vm666, %v1781, %v1783
        %v1785 = vrot.slane %v1687, 2
        %v1786 = vrot.slane %v1688, 2
        %v1787 = vsel %vm666, %v1785, %v1786
        %v1788 = vrot.slane %v1689, 2
        %v1789 = vsel %vm666, %v1786, %v1788
        %v1790 = vrot.slane %v1690, 2
        %v1791 = vrot.slane %v1691, 2
        %v1792 = vsel %vm666, %v1790, %v1791
        %v1793 = vrot.slane %v1692, 2
        %v1794 = vsel %vm666, %v1791, %v1793
        %v1795 = vrot.slane %v1693, 2
        %v1796 = vrot.slane %v1694, 2
        %v1797 = vsel %vm666, %v1795, %v1796
        %v1798 = vrot.slane %v1695, 2
        %v1799 = vsel %vm666, %v1796, %v1798
        %v1800 = vrot.slane %v1696, 2
        %v1801 = vrot.slane %v1697, 2
        %v1802 = vsel %vm666, %v1800, %v1801
        %v1803 = vrot.slane %v1698, 2
        %v1804 = vsel %vm666, %v1801, %v1803
        %v1805 = vrot.slane %v1699, 2
        %v1806 = vrot.slane %v1700, 2
        %v1807 = vsel %vm666, %v1805, %v1806
        %v1808 = vrot.slane %v1701, 2
        %v1809 = vsel %vm666, %v1806, %v1808
        %v1810 = vrot.slane %v1702, 2
        %v1811 = vrot.slane %v1703, 2
        %v1812 = vsel %vm666, %v1810, %v1811
        %v1813 = vrot.slane %v1704, 2
        %v1814 = vsel %vm666, %v1811, %v1813
        %v1815 = vrot.slane %v1705, 2
        %v1816 = vrot.slane %v1706, 2
        %v1817 = vsel %vm666, %v1815, %v1816
        %v1818 = vrot.slane %v1707, 2
        %v1819 = vsel %vm666, %v1816, %v1818
        %v1820 = vrot.slane %v1708, 2
        %v1821 = vrot.slane %v1709, 2
        %v1822 = vsel %vm666, %v1820, %v1821
        %v1823 = vrot.slane %v1710, 2
        %v1824 = vsel %vm666, %v1821, %v1823
        %v1825 = vrot.slane %v1711, 2
        %v1826 = vrot.slane %v1712, 2
        %v1827 = vsel %vm666, %v1825, %v1826
        %v1828 = vrot.slane %v1713, 2
        %v1829 = vsel %vm666, %v1826, %v1828
        %v1830 = vrot.slane %v1714, 2
        %v1831 = vrot.slane %v1715, 2
        %v1832 = vsel %vm666, %v1830, %v1831
        %v1833 = vrot.slane %v1716, 2
        %v1834 = vsel %vm666, %v1831, %v1833
        %v1835 = vrot.slane %v1717, 2
        %v1836 = vrot.slane %v1718, 2
        %v1837 = vsel %vm666, %v1835, %v1836
        %v1838 = vrot.slane %v1719, 2
        %v1839 = vsel %vm666, %v1836, %v1838
        %v1840 = vrot.slane %v1720, 2
        %v1841 = vrot.slane %v1721, 2
        %v1842 = vsel %vm666, %v1840, %v1841
        %v1843 = vrot.slane %v1722, 2
        %v1844 = vsel %vm666, %v1841, %v1843
        %v1845 = vrot.slane %v1723, 2
        %v1846 = vrot.slane %v1724, 2
        %v1847 = vsel %vm666, %v1845, %v1846
        %v1848 = vrot.slane %v1725, 2
        %v1849 = vsel %vm666, %v1846, %v1848
        %v1850 = vrot.slane %v1726, 2
        %v1851 = vrot.slane %v1727, 2
        %v1852 = vsel %vm666, %v1850, %v1851
        %v1853 = vrot.slane %v1728, 2
        %v1854 = vsel %vm666, %v1851, %v1853
        %v1855 = vrot.slane %v1729, 2
        %v1856 = vrot.slane %v1730, 2
        %v1857 = vsel %vm666, %v1855, %v1856
        %v1858 = vrot.slane %v1731, 2
        %v1859 = vsel %vm666, %v1856, %v1858
        %v1892 = vadd.f32 %v1648, %v1782
        %v1893 = vadd.f32 %v1649, %v1784
        %v1894 = vadd.f32 %v1650, %v1787
        %v1895 = vadd.f32 %v1651, %v1789
        %v1896 = vadd.f32 %v1652, %v1792
        %v1897 = vadd.f32 %v1653, %v1794
        %v1898 = vadd.f32 %v1654, %v1797
        %v1899 = vadd.f32 %v1655, %v1799
        %v1900 = vadd.f32 %v1656, %v1802
        %v1901 = vadd.f32 %v1657, %v1804
        %v1902 = vadd.f32 %v1658, %v1807
        %v1903 = vadd.f32 %v1659, %v1809
        %v1904 = vadd.f32 %v1660, %v1812
        %v1905 = vadd.f32 %v1661, %v1814
        %v1906 = vadd.f32 %v1662, %v1817
        %v1907 = vadd.f32 %v1663, %v1819
        %v1908 = vadd.f32 %v1664, %v1822
        %v1909 = vadd.f32 %v1665, %v1824
        %v1910 = vadd.f32 %v1666, %v1827
        %v1911 = vadd.f32 %v1667, %v1829
        %v1912 = vadd.f32 %v1668, %v1832
        %v1913 = vadd.f32 %v1669, %v1834
        %v1914 = vadd.f32 %v1670, %v1837
        %v1915 = vadd.f32 %v1671, %v1839
        %v1916 = vadd.f32 %v1672, %v1842
        %v1917 = vadd.f32 %v1673, %v1844
        %v1918 = vadd.f32 %v1674, %v1847
        %v1919 = vadd.f32 %v1675, %v1849
        %v1920 = vadd.f32 %v1676, %v1852
        %v1921 = vadd.f32 %v1677, %v1854
        %v1922 = vadd.f32 %v1678, %v1857
        %v1923 = vadd.f32 %v1679, %v1859
        %v1924 = vlaneseq
        %v1925 = vshrl.u32 %v1924, 7
        %v1926 = vsub.s32 0, %v1925
        %v1927 = vrot.slane %v497, %v1926
        %v1928 = vmul.f32 %v448, %v1927
        %v1929 = vmul.f32 %v449, %v1927
        %v1930 = vmul.f32 %v450, %v1927
        %v1931 = vmul.f32 %v451, %v1927
        %v1932 = vmul.f32 %v452, %v1927
        %v1933 = vmul.f32 %v453, %v1927
        %v1934 = vmul.f32 %v454, %v1927
        %v1935 = vmul.f32 %v455, %v1927
        %v1936 = vmul.f32 %v456, %v1927
        %v1937 = vmul.f32 %v457, %v1927
        %v1938 = vmul.f32 %v458, %v1927
        %v1939 = vmul.f32 %v459, %v1927
        %v1940 = vmul.f32 %v460, %v1927
        %v1941 = vmul.f32 %v461, %v1927
        %v1942 = vmul.f32 %v462, %v1927
        %v1943 = vmul.f32 %v463, %v1927
        %v1944 = vmul.f32 %v464, %v1927
        %v1945 = vmul.f32 %v465, %v1927
        %v1946 = vmul.f32 %v466, %v1927
        %v1947 = vmul.f32 %v467, %v1927
        %v1948 = vmul.f32 %v468, %v1927
        %v1949 = vmul.f32 %v469, %v1927
        %v1950 = vmul.f32 %v470, %v1927
        %v1951 = vmul.f32 %v471, %v1927
        %v1952 = vmul.f32 %v472, %v1927
        %v1953 = vmul.f32 %v473, %v1927
        %v1954 = vmul.f32 %v474, %v1927
        %v1955 = vmul.f32 %v475, %v1927
        %v1956 = vmul.f32 %v476, %v1927
        %v1957 = vmul.f32 %v477, %v1927
        %v1958 = vmul.f32 %v478, %v1927
        %v1959 = vmul.f32 %v479, %v1927
        %v1960 = vmul.f32 %v480, %v1927
        %v1961 = vmul.f32 %v481, %v1927
        %v1962 = vmul.f32 %v482, %v1927
        %v1963 = vmul.f32 %v483, %v1927
        %v1964 = vmul.f32 %v484, %v1927
        %v1965 = vmul.f32 %v485, %v1927
        %v1966 = vmul.f32 %v486, %v1927
        %v1967 = vmul.f32 %v487, %v1927
        %v1968 = vmul.f32 %v488, %v1927
        %v1969 = vmul.f32 %v489, %v1927
        %v1970 = vmul.f32 %v490, %v1927
        %v1971 = vmul.f32 %v491, %v1927
        %v1972 = vmul.f32 %v492, %v1927
        %v1973 = vmul.f32 %v493, %v1927
        %v1974 = vmul.f32 %v494, %v1927
        %v1975 = vmul.f32 %v495, %v1927
        %v2024 = vrot.slane %v1928, 4
        %v2025 = vrot.slane %v1929, 4
        %v2026 = vsel %vm911, %v2024, %v2025
        %v2027 = vrot.slane %v1930, 4
        %v2028 = vsel %vm911, %v2025, %v2027
        %v2029 = vrot.slane %v1931, 4
        %v2030 = vrot.slane %v1932, 4
        %v2031 = vsel %vm911, %v2029, %v2030
        %v2032 = vrot.slane %v1933, 4
        %v2033 = vsel %vm911, %v2030, %v2032
        %v2034 = vrot.slane %v1934, 4
        %v2035 = vrot.slane %v1935, 4
        %v2036 = vsel %vm911, %v2034, %v2035
        %v2037 = vrot.slane %v1936, 4
        %v2038 = vsel %vm911, %v2035, %v2037
        %v2039 = vrot.slane %v1937, 4
        %v2040 = vrot.slane %v1938, 4
        %v2041 = vsel %vm911, %v2039, %v2040
        %v2042 = vrot.slane %v1939, 4
        %v2043 = vsel %vm911, %v2040, %v2042
        %v2044 = vrot.slane %v1940, 4
        %v2045 = vrot.slane %v1941, 4
        %v2046 = vsel %vm911, %v2044, %v2045
        %v2047 = vrot.slane %v1942, 4
        %v2048 = vsel %vm911, %v2045, %v2047
        %v2049 = vrot.slane %v1943, 4
        %v2050 = vrot.slane %v1944, 4
        %v2051 = vsel %vm911, %v2049, %v2050
        %v2052 = vrot.slane %v1945, 4
        %v2053 = vsel %vm911, %v2050, %v2052
        %v2054 = vrot.slane %v1946, 4
        %v2055 = vrot.slane %v1947, 4
        %v2056 = vsel %vm911, %v2054, %v2055
        %v2057 = vrot.slane %v1948, 4
        %v2058 = vsel %vm911, %v2055, %v2057
        %v2059 = vrot.slane %v1949, 4
        %v2060 = vrot.slane %v1950, 4
        %v2061 = vsel %vm911, %v2059, %v2060
        %v2062 = vrot.slane %v1951, 4
        %v2063 = vsel %vm911, %v2060, %v2062
        %v2064 = vrot.slane %v1952, 4
        %v2065 = vrot.slane %v1953, 4
        %v2066 = vsel %vm911, %v2064, %v2065
        %v2067 = vrot.slane %v1954, 4
        %v2068 = vsel %vm911, %v2065, %v2067
        %v2069 = vrot.slane %v1955, 4
        %v2070 = vrot.slane %v1956, 4
        %v2071 = vsel %vm911, %v2069, %v2070
        %v2072 = vrot.slane %v1957, 4
        %v2073 = vsel %vm911, %v2070, %v2072
        %v2074 = vrot.slane %v1958, 4
        %v2075 = vrot.slane %v1959, 4
        %v2076 = vsel %vm911, %v2074, %v2075
        %v2077 = vrot.slane %v1960, 4
        %v2078 = vsel %vm911, %v2075, %v2077
        %v2079 = vrot.slane %v1961, 4
        %v2080 = vrot.slane %v1962, 4
        %v2081 = vsel %vm911, %v2079, %v2080
        %v2082 = vrot.slane %v1963, 4
        %v2083 = vsel %vm911, %v2080, %v2082
        %v2084 = vrot.slane %v1964, 4
        %v2085 = vrot.slane %v1965, 4
        %v2086 = vsel %vm911, %v2084, %v2085
        %v2087 = vrot.slane %v1966, 4
        %v2088 = vsel %vm911, %v2085, %v2087
        %v2089 = vrot.slane %v1967, 4
        %v2090 = vrot.slane %v1968, 4
        %v2091 = vsel %vm911, %v2089, %v2090
        %v2092 = vrot.slane %v1969, 4
        %v2093 = vsel %vm911, %v2090, %v2092
        %v2094 = vrot.slane %v1970, 4
        %v2095 = vrot.slane %v1971, 4
        %v2096 = vsel %vm911, %v2094, %v2095
        %v2097 = vrot.slane %v1972, 4
        %v2098 = vsel %vm911, %v2095, %v2097
        %v2099 = vrot.slane %v1973, 4
        %v2100 = vrot.slane %v1974, 4
        %v2101 = vsel %vm911, %v2099, %v2100
        %v2102 = vrot.slane %v1975, 4
        %v2103 = vsel %vm911, %v2100, %v2102
        %v2136 = vadd.f32 %v1892, %v2026
        %v2137 = vadd.f32 %v1893, %v2028
        %v2138 = vadd.f32 %v1894, %v2031
        %v2139 = vadd.f32 %v1895, %v2033
        %v2140 = vadd.f32 %v1896, %v2036
        %v2141 = vadd.f32 %v1897, %v2038
        %v2142 = vadd.f32 %v1898, %v2041
        %v2143 = vadd.f32 %v1899, %v2043
        %v2144 = vadd.f32 %v1900, %v2046
        %v2145 = vadd.f32 %v1901, %v2048
        %v2146 = vadd.f32 %v1902, %v2051
        %v2147 = vadd.f32 %v1903, %v2053
        %v2148 = vadd.f32 %v1904, %v2056
        %v2149 = vadd.f32 %v1905, %v2058
        %v2150 = vadd.f32 %v1906, %v2061
        %v2151 = vadd.f32 %v1907, %v2063
        %v2152 = vadd.f32 %v1908, %v2066
        %v2153 = vadd.f32 %v1909, %v2068
        %v2154 = vadd.f32 %v1910, %v2071
        %v2155 = vadd.f32 %v1911, %v2073
        %v2156 = vadd.f32 %v1912, %v2076
        %v2157 = vadd.f32 %v1913, %v2078
        %v2158 = vadd.f32 %v1914, %v2081
        %v2159 = vadd.f32 %v1915, %v2083
        %v2160 = vadd.f32 %v1916, %v2086
        %v2161 = vadd.f32 %v1917, %v2088
        %v2162 = vadd.f32 %v1918, %v2091
        %v2163 = vadd.f32 %v1919, %v2093
        %v2164 = vadd.f32 %v1920, %v2096
        %v2165 = vadd.f32 %v1921, %v2098
        %v2166 = vadd.f32 %v1922, %v2101
        %v2167 = vadd.f32 %v1923, %v2103
        %v2168 = vpack.c.bf16 %v2137, %v2136
        %v2169 = vpack.c.bf16 %v2139, %v2138
        %v2170 = vpack.c.bf16 %v2141, %v2140
        %v2171 = vpack.c.bf16 %v2143, %v2142
        %v2172 = vpack.c.bf16 %v2145, %v2144
        %v2173 = vpack.c.bf16 %v2147, %v2146
        %v2174 = vpack.c.bf16 %v2149, %v2148
        %v2175 = vpack.c.bf16 %v2151, %v2150
        %v2176 = vpack.c.bf16 %v2153, %v2152
        %v2177 = vpack.c.bf16 %v2155, %v2154
        %v2178 = vpack.c.bf16 %v2157, %v2156
        %v2179 = vpack.c.bf16 %v2159, %v2158
        %v2180 = vpack.c.bf16 %v2161, %v2160
        %v2181 = vpack.c.bf16 %v2163, %v2162
        %v2182 = vpack.c.bf16 %v2165, %v2164
        %v2183 = vpack.c.bf16 %v2167, %v2166
        %v2184 = vld [vmem:[%s2] sm:$0xf]
        %v2186 = vsel %vm245, %v2184, 0
        %v2189 = vsel %vm245, %v2168, 0
        %v2192 = vsel %vm245, %v2169, 0
        %v2195 = vsel %vm245, %v2170, 0
        %v2198 = vsel %vm245, %v2171, 0
        %v2201 = vsel %vm245, %v2172, 0
        %v2204 = vsel %vm245, %v2173, 0
        %v2207 = vsel %vm245, %v2174, 0
        %v2210 = vsel %vm245, %v2175, 0
        %v2213 = vsel %vm245, %v2176, 0
        %v2216 = vsel %vm245, %v2177, 0
        %v2219 = vsel %vm245, %v2178, 0
        %v2222 = vsel %vm245, %v2179, 0
        %v2225 = vsel %vm245, %v2180, 0
        %v2228 = vsel %vm245, %v2181, 0
        %v2231 = vsel %vm245, %v2182, 0
        %v2234 = vsel %vm245, %v2183, 0
        %2236 = vmatprep.subr.bf16.mxu0 0
        %2237 = vmatpush1.bf16.xpose.msra.mxu0 %v2210
        %2238 = vmatprep.subr.bf16.mxu0 0
        %2239 = vmatpush1.bf16.xpose.msra.mxu0 %v2207
        %2240 = vmatprep.subr.bf16.mxu0 0
        %2241 = vmatpush1.bf16.xpose.msra.mxu0 %v2204
        %2242 = vmatprep.subr.bf16.mxu0 0
        %2243 = vmatpush1.bf16.xpose.msra.mxu0 %v2201
        %2244 = vmatprep.subr.bf16.mxu0 0
        %2245 = vmatpush1.bf16.xpose.msra.mxu0 %v2198
        %2246 = vmatprep.subr.bf16.mxu0 0
        %2247 = vmatpush1.bf16.xpose.msra.mxu0 %v2195
        %2248 = vmatprep.subr.bf16.mxu0 0
        %2249 = vmatpush1.bf16.xpose.msra.mxu0 %v2192
        %2250 = vmatprep.subr.bf16.mxu0 0
        %2251 = vmatpush1.bf16.xpose.msra.mxu0 %v2189
        %2252 = vmatprep.subr.bf16.mxu0 0
        %2253 = vmatpush2.bf16.xpose.msra.mxu0 %v2234
        %2254 = vmatprep.subr.bf16.mxu0 0
        %2255 = vmatpush2.bf16.xpose.msra.mxu0 %v2231
        %2256 = vmatprep.subr.bf16.mxu0 0
        %2257 = vmatpush2.bf16.xpose.msra.mxu0 %v2228
        %2258 = vmatprep.subr.bf16.mxu0 0
        %2259 = vmatpush2.bf16.xpose.msra.mxu0 %v2225
        %2260 = vmatprep.subr.bf16.mxu0 0
        %2261 = vmatpush2.bf16.xpose.msra.mxu0 %v2222
        %2262 = vmatprep.subr.bf16.mxu0 0
        %2263 = vmatpush2.bf16.xpose.msra.mxu0 %v2219
        %2264 = vmatprep.subr.bf16.mxu0 0
        %2265 = vmatpush2.bf16.xpose.msra.mxu0 %v2216
        %2266 = vmatprep.subr.bf16.mxu0 0
        %2267 = vmatpush2.bf16.xpose.msra.mxu0 %v2213
        %2268 = vmatprep.mubr.bf16.mxu0 0
        %2269 = vmatmul.mubr.bf16.gmra.mxu0 %v2186
        %v2270 = vpop.f32.mrf.mxu0
        %v2271 = vadd.f32 0.0, %v2270
        %v2272 = vpop.f32.mrf.mxu0
        %v2273 = vadd.f32 0.0, %v2272
        %v2274 = vpop.f32.mrf.mxu0
        %v2275 = vpop.f32.mrf.mxu0
        %2276 = vdwg.mxu0
        %2277 = vst [vmem:[%s218] sm:$0xff] %v2271
        %2278 = vst [vmem:[%s218 + $0x8] sm:$0xff] %v2273
        %v2279 = vadd.f32 %v2271, %v2273
        %2280 = vadd.xlane.f32.xlu0 %v2279
        %v2281 = vpop.xlane.xlu0 %2280
        %vm2282 = vcmask 7168
        %2283 = vst.msk [vmem:[%s239] sm:$0xff] %vm2282, %v2281
        %v2284 = vmul.f32 %v2271, %v2271
        %v2285 = vmul.f32 %v2273, %v2273
        %v2286 = vadd.f32 %v2284, %v2285
        %2287 = vadd.xlane.f32.xlu0 %v2286
        %v2288 = vpop.xlane.xlu0 %2287
        %2289 = vst.msk [vmem:[%s243] sm:$0xff] %vm2282, %v2288
        %s2290 = sand.u32 %s96, 1
        %s2291 = scalar_lea.sflag [#allocation4], %s2290
        %s2292 = sand.u32 %s96, 1
        %s2293 = smul.addr %s2292, 16
        %s2294 = scalar_lea.vmem [#allocation3], %s2293
        %p2295 = scmp.lt.s32.totalorder %s20, 1
        %s2296 = scalar_select %p2295, %s20, 1
        %s2297 = smul.addr %s2296, 8
        %s2298 = scalar_lea.vmem %s4, %s2297
        %p2299 = scmp.lt.s32.totalorder %s20, 1
        %s2300 = scalar_select %p2299, %s20, 1
        %s2301 = smul.addr %s2300, 8
        %s2302 = scalar_lea.vmem %s5, %s2301
        // Predicated region
        $region33: #{tpu_custom_call.1} parent=31 // pred_check
          %p2303 = pneg %p106
        $region34: #{tpu_custom_call.1} parent=31 // pred_check_branch
          %2305 = sbr.rel (%p2303) target = $region36
        $region35: #{tpu_custom_call.1} parent=31 // pred_region
          %s2307 = ssub.s32 256, 256
          %2308 = vsyncadd %s2291, %s2307
          %s2309 = smul.addr %s20, 2
          %s2310 = smul.addr %s2309, 128
          %s2311 = scalar_lea.hbm %s3, %s2310
          %s2313 = sshll.u32 %s2294, 4
          %s2314 = int_to_ptr.vmem [resolvable:$true] %s2313
          %2316 = dma.vmem_to_hbm [thread:$0]  %s2314, 256, %s2311, %s2291
        $region36: #{tpu_custom_call.1} parent=31 // pred_fallthru
          _
        // Predicated region
        $region37: #{tpu_custom_call.1} parent=31 // pred_check
          %p2317 = pneg %p132
        $region38: #{tpu_custom_call.1} parent=31 // pred_check_branch
          %2319 = sbr.rel (%p2317) target = $region40
        $region39: #{tpu_custom_call.1} parent=31 // pred_region
          _
        $region40: #{tpu_custom_call.1} parent=31 // pred_fallthru
          _
        // Predicated region
        $region41: #{tpu_custom_call.1} parent=31 // pred_check
          %p2320 = pneg %p158
        $region42: #{tpu_custom_call.1} parent=31 // pred_check_branch
          %2322 = sbr.rel (%p2320) target = $region44
        $region43: #{tpu_custom_call.1} parent=31 // pred_region
          _
        $region44: #{tpu_custom_call.1} parent=31 // pred_fallthru
          _
      $region32: #{tpu_custom_call.1} parent=5 // pred_fallthru
        _
      %p2323 = scmp.le.s32.totalorder 2, %s15
      // Predicated region
      $region45: #{tpu_custom_call.1} parent=5 // pred_check
        %p2324 = pneg %p2323
      $region46: #{tpu_custom_call.1} parent=5 // pred_check_branch
        %2326 = sbr.rel (%p2324) target = $region48
      $region47: #{tpu_custom_call.1} parent=5 // pred_region
        %s2327 = ssub.s32 %s15, 2
        // Predicated region
        $region49: #{tpu_custom_call.1} parent=47 // pred_check
          %p2328 = pneg %p112
        $region50: #{tpu_custom_call.1} parent=47 // pred_check_branch
          %2330 = sbr.rel (%p2328) target = $region52
        $region51: #{tpu_custom_call.1} parent=47 // pred_region
          %s2331 = sand.u32 %s97, 1
          %s2332 = scalar_lea.sflag [#allocation4], %s2331
          %s2333 = sand.u32 %s97, 1
          %s2334 = smul.addr %s2333, 16
          %s2335 = scalar_lea.vmem [#allocation3], %s2334
          %2336 = dma.done %s2332, 256
        $region52: #{tpu_custom_call.1} parent=47 // pred_fallthru
          _
        // Predicated region
        $region53: #{tpu_custom_call.1} parent=47 // pred_check
          %p2337 = pneg %p138
        $region54: #{tpu_custom_call.1} parent=47 // pred_check_branch
          %2339 = sbr.rel (%p2337) target = $region56
        $region55: #{tpu_custom_call.1} parent=47 // pred_region
          %p2340 = scmp.lt.s32.totalorder %s21, 1
          %s2341 = scalar_select %p2340, %s21, 1
          %s2342 = smul.addr %s2341, 8
          %s2343 = scalar_lea.vmem %s4, %s2342
        $region56: #{tpu_custom_call.1} parent=47 // pred_fallthru
          _
        // Predicated region
        $region57: #{tpu_custom_call.1} parent=47 // pred_check
          %p2344 = pneg %p164
        $region58: #{tpu_custom_call.1} parent=47 // pred_check_branch
          %2346 = sbr.rel (%p2344) target = $region60
        $region59: #{tpu_custom_call.1} parent=47 // pred_region
          %p2347 = scmp.lt.s32.totalorder %s21, 1
          %s2348 = scalar_select %p2347, %s21, 1
          %s2349 = smul.addr %s2348, 8
          %s2350 = scalar_lea.vmem %s5, %s2349
        $region60: #{tpu_custom_call.1} parent=47 // pred_fallthru
          _
      $region48: #{tpu_custom_call.1} parent=5 // pred_fallthru
        _
    $region6: #{tpu_custom_call.1} parent=1 // loop_footer
      %s19 = sadd.s32 1, %s15
    $region7: #{tpu_custom_call.1} parent=1 // loop_footer_branch
      %14 = sbr.rel target = $region3
    $region8: #{tpu_custom_call.1} parent=1 // loop_exit
      _
    %2351 = vsyncpa [#allocation4], 1
    %s2352 = scalar_lea.sflag [#allocation4], 1
    %2353 = vsyncpa %s2352, 1

</llo_original>
